<compile_context>
chip_gen: v6e
topology: v6e:2x2x1
jax: 0.10.0
libtpu: 0.0.40
codegen_flags: <defaults>
</compile_context>

<pallas_src>
import numpy as np
import jax
import jax.numpy as jnp
from jax.experimental import pallas as pl
from jax.experimental.pallas import tpu as pltpu

# ----------------------------- configuration --------------------------------
STAGE = 3            # Light_Enhance_V3(stage=3)
ENH_LAYERS = 3       # enhance_layer
CAL_LAYERS = 3       # calibrate_layer
BN_EPS = 1e-5

# ------------------- deterministic parameter initialisation -----------------
# Mirrors weights_init(): Conv2d weight ~ N(0, 0.02), bias = 0,
# BatchNorm2d gamma ~ N(1, 0.02), beta = 0, running stats (0, 1).
_rng = np.random.RandomState(0)


def _conv_init():
    w = _rng.normal(0.0, 0.02, size=(3, 3)).astype(np.float32)  # (1,1,3,3)->(3,3)
    return w, 0.0


def _bn_init():
    gamma = float(_rng.normal(1.0, 0.02))
    scale = gamma / float(np.sqrt(1.0 + BN_EPS))   # rv=1, rm=0
    shift = 0.0                                     # beta=0, rm=0
    return scale, shift


def _fold(conv, bn):
    """Fold eval-mode BN affine into the conv weights/bias (trace-time)."""
    (w, b), (s, sh) = conv, bn
    return w * s, b * s + sh


def _tup(wb):
    w, b = wb
    return tuple(tuple(float(v) for v in row) for row in w), float(b)


# module creation order (EnhanceNetwork then CalibrateNetwork)
_enh_in = _conv_init()
_enh_blk = _conv_init()
_enh_bn = _bn_init()
_enh_out = _conv_init()
_cal_in = _conv_init()
_cal_ibn = _bn_init()
_cal_c1 = _conv_init()
_cal_bn1 = _bn_init()
_cal_c2 = _conv_init()
_cal_bn2 = _bn_init()
_cal_out = _conv_init()

ENH_IN = _tup(_enh_in)                       # Conv(1->1) + ReLU
ENH_BLK = _tup(_fold(_enh_blk, _enh_bn))     # shared block: Conv + BN + ReLU
ENH_OUT = _tup(_enh_out)                     # Conv(1->1) + Sigmoid
CAL_IN = _tup(_fold(_cal_in, _cal_ibn))      # Conv + BN + ReLU
CAL_C1 = _tup(_fold(_cal_c1, _cal_bn1))      # shared block conv #1
CAL_C2 = _tup(_fold(_cal_c2, _cal_bn2))      # shared block conv #2
CAL_OUT = _tup(_cal_out)                     # Conv(1->1) + Sigmoid


# ------------------------------ kernel builder -------------------------------
def _make_kernel(H, Wp, W_valid):
    """Build the per-(image, stage) kernel for a (H, Wp) lane-dense layout
    whose valid image width is W_valid (columns >= W_valid are padding)."""

    def conv3x3(x, wb, masks):
        """3x3 'same' conv, 1 channel, compile-time scalar weights.
        Column/row shifts via pltpu.roll (XLU) + constant border masks.
        rmask also enforces the zero 'same' pad at column W_valid-1, so valid
        outputs never see lane-padding junk."""
        w, b = wb
        lmask, rmask, tmask, bmask = masks
        left = pltpu.roll(x, 1, 1) * lmask          # x[y, j-1], col 0 zeroed
        right = pltpu.roll(x, Wp - 1, 1) * rmask    # x[y, j+1], cols >= W_valid-1 zeroed
        # horizontal 3-tap combinations, one per kernel row
        h0 = w[0][0] * left + w[0][1] * x + w[0][2] * right
        h1 = w[1][0] * left + w[1][1] * x + w[1][2] * right
        h2 = w[2][0] * left + w[2][1] * x + w[2][2] * right
        out = (h1
               + pltpu.roll(h0, 1, 0) * tmask       # h0[y-1], row 0 zeroed
               + pltpu.roll(h2, H - 1, 0) * bmask)  # h2[y+1], row H-1 zeroed
        if b != 0.0:
            out = out + b
        return out

    def sigmoid(x):
        # exp + reciprocal both land on the EUP slot
        return pl.reciprocal(1.0 + jnp.exp(-x), approx=True)

    def enhance(x, masks):
        fea = jax.nn.relu(conv3x3(x, ENH_IN, masks))

        def body(_, f):                              # shared-weight residual blocks
            return f + jax.nn.relu(conv3x3(f, ENH_BLK, masks))

        fea = jax.lax.fori_loop(0, ENH_LAYERS, body, fea, unroll=True)
        fea = sigmoid(conv3x3(fea, ENH_OUT, masks))
        return jnp.clip(fea + x, 0.0001, 1.0)

    def calibrate(x, masks):
        fea = jax.nn.relu(conv3x3(x, CAL_IN, masks))

        def body(_, f):                              # shared-weight residual blocks
            t = jax.nn.relu(conv3x3(f, CAL_C1, masks))
            t = jax.nn.relu(conv3x3(t, CAL_C2, masks))
            return f + t

        fea = jax.lax.fori_loop(0, CAL_LAYERS, body, fea, unroll=True)
        fea = sigmoid(conv3x3(fea, CAL_OUT, masks))
        return x - fea

    def kernel(x_ref, il_ref, rl_ref, inl_ref, att_ref, carry_ref):
        s = pl.program_id(1)
        x = x_ref[0]                                 # (H, Wp); padded cols are zero

        # compile-time-constant border masks (hoisted out of all conv calls)
        col = jax.lax.broadcasted_iota(jnp.int32, (H, Wp), 1)
        row = jax.lax.broadcasted_iota(jnp.int32, (H, Wp), 0)
        one = jnp.float32(1.0)
        zero = jnp.float32(0.0)
        lmask = jnp.where(col > 0, one, zero)
        rmask = jnp.where(col < W_valid - 1, one, zero)   # 'same' pad + lane-pad guard
        tmask = jnp.where(row > 0, one, zero)
        bmask = jnp.where(row < H - 1, one, zero)
        masks = (lmask, rmask, tmask, bmask)

        # stage carry (input_op) lives in persistent VMEM scratch
        @pl.when(s == 0)
        def _():
            carry_ref[...] = x

        inp = carry_ref[...]
        inl_ref[0, 0] = inp

        i_img = enhance(inp, masks)
        r = jnp.clip(x * pl.reciprocal(i_img, approx=True), 0.0, 1.0)
        att = calibrate(r, masks)

        @pl.when(s + 1 < pl.num_programs(1))         # carry only needed for next stage
        def _():
            carry_ref[...] = x + att                 # input_op for next stage

        il_ref[0, 0] = i_img
        rl_ref[0, 0] = r
        att_ref[0, 0] = jnp.abs(att)

    return kernel


# -------------------------------- wrapper -------------------------------------
def light_enhance_v3(x_nchw):
    """x_nchw: (N, 1, H, W) float32 -> (ilist, rlist, inlist, attlist),
    each a list of `STAGE` arrays of shape (N, 1, H, W)."""
    N, C, H, W = x_nchw.shape
    assert C == 1, "Light_Enhance_V3 operates on single-channel images"
    x = x_nchw[:, 0].astype(jnp.float32)             # (N, H, W)

    # lane-dense layout: pad width to a multiple of 128 (zero pad, masked in-kernel)
    Wp = ((W + 127) // 128) * 128
    if Wp != W:
        x = jnp.pad(x, ((0, 0), (0, 0), (0, Wp - W)))

    kernel = _make_kernel(H, Wp, W)

    out_shape = tuple(
        jax.ShapeDtypeStruct((N, STAGE, H, Wp), jnp.float32) for _ in range(4)
    )
    out_spec = pl.BlockSpec((1, 1, H, Wp), lambda n, s: (n, s, 0, 0))

    blk_bytes = H * Wp * 4
    vmem_limit = int(min(96 * 2 ** 20, max(32 * 2 ** 20, 40 * blk_bytes)))

    il, rl, inl, att = pl.pallas_call(
        kernel,
        out_shape=out_shape,
        grid_spec=pltpu.PrefetchScalarGridSpec(
            num_scalar_prefetch=0,
            grid=(N, STAGE),                          # batch outer, stage inner
            in_specs=[pl.BlockSpec((1, H, Wp), lambda n, s: (n, 0, 0))],
            out_specs=[out_spec, out_spec, out_spec, out_spec],
            scratch_shapes=[pltpu.VMEM((H, Wp), jnp.float32)],  # stage carry
        ),
        compiler_params=pltpu.CompilerParams(
            dimension_semantics=("parallel", "arbitrary"),
            vmem_limit_bytes=vmem_limit,
        ),
    )(x)

    def to_list(a):  # (N, STAGE, H, Wp) -> list of (N, 1, H, W)
        a = a[:, :, :, :W]
        return [a[:, s][:, None, :, :] for s in range(STAGE)]

    return to_list(il), to_list(rl), to_list(inl), to_list(att)


# ---------------------------------- main --------------------------------------
if __name__ == "__main__":
    key = jax.random.PRNGKey(0)
    N, C, H, W = 2, 1, 16, 16
    # image-like input in [0, 1]
    x = jax.random.uniform(key, (N, C, H, W), dtype=jnp.float32)

    ilist, rlist, inlist, attlist = light_enhance_v3(x)
    jax.block_until_ready((ilist, rlist, inlist, attlist))

    ok = True
    for lst in (ilist, rlist, inlist, attlist):
        assert len(lst) == STAGE
        for a in lst:
            assert a.shape == (N, C, H, W)
            ok = ok and bool(jnp.all(jnp.isfinite(a)))

    # sanity checks that hold by construction
    ok = ok and bool(jnp.allclose(inlist[0], x))                 # stage-0 input_op == input
    ok = ok and bool(jnp.all((ilist[0] >= 1e-4) & (ilist[0] <= 1.0)))   # clamp range
    ok = ok and bool(jnp.all((rlist[0] >= 0.0) & (rlist[0] <= 1.0)))    # clamp range
    ok = ok and bool(jnp.all(attlist[0] >= 0.0))                 # abs()

    assert ok
    print("KERNEL_OK")
</pallas_src>

<mosaic_0001>
module attributes {stable_mosaic.version = 11 : i64} {
  func.func @kernel(%arg0: i32, %arg1: i32, %arg2: memref<1x16x128xf32, #tpu.memory_space<vmem>>, %arg3: memref<1x1x16x128xf32, #tpu.memory_space<vmem>>, %arg4: memref<1x1x16x128xf32, #tpu.memory_space<vmem>>, %arg5: memref<1x1x16x128xf32, #tpu.memory_space<vmem>>, %arg6: memref<1x1x16x128xf32, #tpu.memory_space<vmem>>, %arg7: memref<16x128xf32, #tpu.memory_space<vmem>>) attributes {dimension_semantics = [#tpu.dimension_semantics<parallel>, #tpu.dimension_semantics<arbitrary>], iteration_bounds = array<i64: 2, 3>, scalar_prefetch = 0 : i64, scratch_operands = 1 : i64, tpu.core_type = #tpu.core_type<tc>, window_params = [{transform_indices = @transform_0, window_bounds = array<i64: 1, 16, 128>}, {transform_indices = @transform_1, window_bounds = array<i64: 1, 1, 16, 128>}, {transform_indices = @transform_2, window_bounds = array<i64: 1, 1, 16, 128>}, {transform_indices = @transform_3, window_bounds = array<i64: 1, 1, 16, 128>}, {transform_indices = @transform_4, window_bounds = array<i64: 1, 1, 16, 128>}]} {
    %c0 = arith.constant 0 : index
    %c0_0 = arith.constant 0 : index
    %c0_1 = arith.constant 0 : index
    %0 = vector.load %arg2[%c0, %c0_0, %c0_1] : memref<1x16x128xf32, #tpu.memory_space<vmem>>, vector<1x16x128xf32>
    %1 = vector.shape_cast %0 : vector<1x16x128xf32> to vector<16x128xf32>
    %2 = tpu.iota {dimensions = array<i32: 1>} : vector<16x128xi32>
    %3 = tpu.iota {dimensions = array<i32: 0>} : vector<16x128xi32>
    %c0_i32 = arith.constant 0 : i32
    %4 = vector.broadcast %c0_i32 : i32 to vector<16x128xi32>
    %5 = arith.cmpi sgt, %2, %4 : vector<16x128xi32>
    %cst = arith.constant 1.000000e+00 : f32
    %cst_2 = arith.constant 0.000000e+00 : f32
    %6 = vector.broadcast %cst : f32 to vector<16x128xf32>
    %7 = vector.broadcast %cst_2 : f32 to vector<16x128xf32>
    %8 = arith.select %5, %6, %7 : vector<16x128xi1>, vector<16x128xf32>
    %c15_i32 = arith.constant 15 : i32
    %9 = vector.broadcast %c15_i32 : i32 to vector<16x128xi32>
    %10 = arith.cmpi slt, %2, %9 : vector<16x128xi32>
    %cst_3 = arith.constant 1.000000e+00 : f32
    %cst_4 = arith.constant 0.000000e+00 : f32
    %11 = vector.broadcast %cst_3 : f32 to vector<16x128xf32>
    %12 = vector.broadcast %cst_4 : f32 to vector<16x128xf32>
    %13 = arith.select %10, %11, %12 : vector<16x128xi1>, vector<16x128xf32>
    %c0_i32_5 = arith.constant 0 : i32
    %14 = vector.broadcast %c0_i32_5 : i32 to vector<16x128xi32>
    %15 = arith.cmpi sgt, %3, %14 : vector<16x128xi32>
    %cst_6 = arith.constant 1.000000e+00 : f32
    %cst_7 = arith.constant 0.000000e+00 : f32
    %16 = vector.broadcast %cst_6 : f32 to vector<16x128xf32>
    %17 = vector.broadcast %cst_7 : f32 to vector<16x128xf32>
    %18 = arith.select %15, %16, %17 : vector<16x128xi1>, vector<16x128xf32>
    %c15_i32_8 = arith.constant 15 : i32
    %19 = vector.broadcast %c15_i32_8 : i32 to vector<16x128xi32>
    %20 = arith.cmpi slt, %3, %19 : vector<16x128xi32>
    %cst_9 = arith.constant 1.000000e+00 : f32
    %cst_10 = arith.constant 0.000000e+00 : f32
    %21 = vector.broadcast %cst_9 : f32 to vector<16x128xf32>
    %22 = vector.broadcast %cst_10 : f32 to vector<16x128xf32>
    %23 = arith.select %20, %21, %22 : vector<16x128xi1>, vector<16x128xf32>
    %c0_i32_11 = arith.constant 0 : i32
    %24 = arith.cmpi eq, %arg1, %c0_i32_11 : i32
    %25 = arith.extui %24 : i1 to i32
    %c0_i32_12 = arith.constant 0 : i32
    %26 = arith.cmpi ne, %25, %c0_i32_12 : i32
    scf.if %26 {
      %c0_224 = arith.constant 0 : index
      %c0_225 = arith.constant 0 : index
      %539 = vector.load %arg7[%c0_224, %c0_225] : memref<16x128xf32, #tpu.memory_space<vmem>>, vector<16x128xf32>
      tpu.vector_store %arg7[%c0_224, %c0_225], %1 {strides = array<i32>} : memref<16x128xf32, #tpu.memory_space<vmem>>, vector<16x128xf32>,
    } else {
    }
    %c0_13 = arith.constant 0 : index
    %c0_14 = arith.constant 0 : index
    %27 = vector.load %arg7[%c0_13, %c0_14] : memref<16x128xf32, #tpu.memory_space<vmem>>, vector<16x128xf32>
    %c0_15 = arith.constant 0 : index
    %c0_16 = arith.constant 0 : index
    %c0_17 = arith.constant 0 : index
    %c0_18 = arith.constant 0 : index
    %28 = vector.load %arg5[%c0_15, %c0_16, %c0_17, %c0_18] : memref<1x1x16x128xf32, #tpu.memory_space<vmem>>, vector<1x1x16x128xf32>
    %29 = vector.shape_cast %28 : vector<1x1x16x128xf32> to vector<16x128xf32>
    %30 = vector.shape_cast %27 : vector<16x128xf32> to vector<1x1x16x128xf32>
    tpu.vector_store %arg5[%c0_15, %c0_16, %c0_17, %c0_18], %30 {strides = array<i32>} : memref<1x1x16x128xf32, #tpu.memory_space<vmem>>, vector<1x1x16x128xf32>,
    %c1_i32 = arith.constant 1 : i32
    %31 = tpu.dynamic_rotate %27 by %c1_i32 dim 1 : vector<16x128xf32>, i32 -> vector<16x128xf32>
    %32 = arith.mulf %31, %8 : vector<16x128xf32>
    %c127_i32 = arith.constant 127 : i32
    %33 = tpu.dynamic_rotate %27 by %c127_i32 dim 1 : vector<16x128xf32>, i32 -> vector<16x128xf32>
    %34 = arith.mulf %33, %13 : vector<16x128xf32>
    %cst_19 = arith.constant 0.0352810472 : f32
    %35 = vector.broadcast %cst_19 : f32 to vector<16x128xf32>
    %36 = arith.mulf %35, %32 : vector<16x128xf32>
    %cst_20 = arith.constant 0.00800314452 : f32
    %37 = vector.broadcast %cst_20 : f32 to vector<16x128xf32>
    %38 = arith.mulf %37, %27 : vector<16x128xf32>
    %39 = arith.addf %36, %38 : vector<16x128xf32>
    %cst_21 = arith.constant 0.0195747595 : f32
    %40 = vector.broadcast %cst_21 : f32 to vector<16x128xf32>
    %41 = arith.mulf %40, %34 : vector<16x128xf32>
    %42 = arith.addf %39, %41 : vector<16x128xf32>
    %cst_22 = arith.constant 0.0448178649 : f32
    %43 = vector.broadcast %cst_22 : f32 to vector<16x128xf32>
    %44 = arith.mulf %43, %32 : vector<16x128xf32>
    %cst_23 = arith.constant 0.0373511612 : f32
    %45 = vector.broadcast %cst_23 : f32 to vector<16x128xf32>
    %46 = arith.mulf %45, %27 : vector<16x128xf32>
    %47 = arith.addf %44, %46 : vector<16x128xf32>
    %cst_24 = arith.constant -0.019545557 : f32
    %48 = vector.broadcast %cst_24 : f32 to vector<16x128xf32>
    %49 = arith.mulf %48, %34 : vector<16x128xf32>
    %50 = arith.addf %47, %49 : vector<16x128xf32>
    %cst_25 = arith.constant 0.0190017689 : f32
    %51 = vector.broadcast %cst_25 : f32 to vector<16x128xf32>
    %52 = arith.mulf %51, %32 : vector<16x128xf32>
    %cst_26 = arith.constant -0.00302714412 : f32
    %53 = vector.broadcast %cst_26 : f32 to vector<16x128xf32>
    %54 = arith.mulf %53, %27 : vector<16x128xf32>
    %55 = arith.addf %52, %54 : vector<16x128xf32>
    %cst_27 = arith.constant -0.00206437707 : f32
    %56 = vector.broadcast %cst_27 : f32 to vector<16x128xf32>
    %57 = arith.mulf %56, %34 : vector<16x128xf32>
    %58 = arith.addf %55, %57 : vector<16x128xf32>
    %c1_i32_28 = arith.constant 1 : i32
    %59 = tpu.dynamic_rotate %42 by %c1_i32_28 dim 0 : vector<16x128xf32>, i32 -> vector<16x128xf32>
    %60 = arith.mulf %59, %18 : vector<16x128xf32>
    %61 = arith.addf %50, %60 : vector<16x128xf32>
    %c15_i32_29 = arith.constant 15 : i32
    %62 = tpu.dynamic_rotate %58 by %c15_i32_29 dim 0 : vector<16x128xf32>, i32 -> vector<16x128xf32>
    %63 = arith.mulf %62, %23 : vector<16x128xf32>
    %64 = arith.addf %61, %63 : vector<16x128xf32>
    %cst_30 = arith.constant 0.000000e+00 : f32
    %65 = vector.broadcast %cst_30 : f32 to vector<16x128xf32>
    %66 = arith.maximumf %64, %65 : vector<16x128xf32>
    %c0_i32_31 = arith.constant 0 : i32
    %c1_i32_32 = arith.constant 1 : i32
    %67 = tpu.dynamic_rotate %66 by %c1_i32_32 dim 1 : vector<16x128xf32>, i32 -> vector<16x128xf32>
    %68 = arith.mulf %67, %8 : vector<16x128xf32>
    %c127_i32_33 = arith.constant 127 : i32
    %69 = tpu.dynamic_rotate %66 by %c127_i32_33 dim 1 : vector<16x128xf32>, i32 -> vector<16x128xf32>
    %70 = arith.mulf %69, %13 : vector<16x128xf32>
    %cst_34 = arith.constant 0.00826334767 : f32
    %71 = vector.broadcast %cst_34 : f32 to vector<16x128xf32>
    %72 = arith.mulf %71, %68 : vector<16x128xf32>
    %cst_35 = arith.constant 0.00289889518 : f32
    %73 = vector.broadcast %cst_35 : f32 to vector<16x128xf32>
    %74 = arith.mulf %73, %66 : vector<16x128xf32>
    %75 = arith.addf %72, %74 : vector<16x128xf32>
    %cst_36 = arith.constant 0.0292674396 : f32
    %76 = vector.broadcast %cst_36 : f32 to vector<16x128xf32>
    %77 = arith.mulf %76, %70 : vector<16x128xf32>
    %78 = arith.addf %75, %77 : vector<16x128xf32>
    %cst_37 = arith.constant 0.0153159807 : f32
    %79 = vector.broadcast %cst_37 : f32 to vector<16x128xf32>
    %80 = arith.mulf %79, %68 : vector<16x128xf32>
    %cst_38 = arith.constant 0.00244872505 : f32
    %81 = vector.broadcast %cst_38 : f32 to vector<16x128xf32>
    %82 = arith.mulf %81, %66 : vector<16x128xf32>
    %83 = arith.addf %80, %82 : vector<16x128xf32>
    %cst_39 = arith.constant 0.00893280376 : f32
    %84 = vector.broadcast %cst_39 : f32 to vector<16x128xf32>
    %85 = arith.mulf %84, %70 : vector<16x128xf32>
    %86 = arith.addf %83, %85 : vector<16x128xf32>
    %cst_40 = arith.constant 0.00671523809 : f32
    %87 = vector.broadcast %cst_40 : f32 to vector<16x128xf32>
    %88 = arith.mulf %87, %68 : vector<16x128xf32>
    %cst_41 = arith.constant 0.0300685316 : f32
    %89 = vector.broadcast %cst_41 : f32 to vector<16x128xf32>
    %90 = arith.mulf %89, %66 : vector<16x128xf32>
    %91 = arith.addf %88, %90 : vector<16x128xf32>
    %cst_42 = arith.constant -0.0041288361 : f32
    %92 = vector.broadcast %cst_42 : f32 to vector<16x128xf32>
    %93 = arith.mulf %92, %70 : vector<16x128xf32>
    %94 = arith.addf %91, %93 : vector<16x128xf32>
    %c1_i32_43 = arith.constant 1 : i32
    %95 = tpu.dynamic_rotate %78 by %c1_i32_43 dim 0 : vector<16x128xf32>, i32 -> vector<16x128xf32>
    %96 = arith.mulf %95, %18 : vector<16x128xf32>
    %97 = arith.addf %86, %96 : vector<16x128xf32>
    %c15_i32_44 = arith.constant 15 : i32
    %98 = tpu.dynamic_rotate %94 by %c15_i32_44 dim 0 : vector<16x128xf32>, i32 -> vector<16x128xf32>
    %99 = arith.mulf %98, %23 : vector<16x128xf32>
    %100 = arith.addf %97, %99 : vector<16x128xf32>
    %cst_45 = arith.constant 0.000000e+00 : f32
    %101 = vector.broadcast %cst_45 : f32 to vector<16x128xf32>
    %102 = arith.maximumf %100, %101 : vector<16x128xf32>
    %103 = arith.addf %66, %102 : vector<16x128xf32>
    %c1_i32_46 = arith.constant 1 : i32
    %c1_i32_47 = arith.constant 1 : i32
    %104 = tpu.dynamic_rotate %103 by %c1_i32_47 dim 1 : vector<16x128xf32>, i32 -> vector<16x128xf32>
    %105 = arith.mulf %104, %8 : vector<16x128xf32>
    %c127_i32_48 = arith.constant 127 : i32
    %106 = tpu.dynamic_rotate %103 by %c127_i32_48 dim 1 : vector<16x128xf32>, i32 -> vector<16x128xf32>
    %107 = arith.mulf %106, %13 : vector<16x128xf32>
    %cst_49 = arith.constant 0.00826334767 : f32
    %108 = vector.broadcast %cst_49 : f32 to vector<16x128xf32>
    %109 = arith.mulf %108, %105 : vector<16x128xf32>
    %cst_50 = arith.constant 0.00289889518 : f32
    %110 = vector.broadcast %cst_50 : f32 to vector<16x128xf32>
    %111 = arith.mulf %110, %103 : vector<16x128xf32>
    %112 = arith.addf %109, %111 : vector<16x128xf32>
    %cst_51 = arith.constant 0.0292674396 : f32
    %113 = vector.broadcast %cst_51 : f32 to vector<16x128xf32>
    %114 = arith.mulf %113, %107 : vector<16x128xf32>
    %115 = arith.addf %112, %114 : vector<16x128xf32>
    %cst_52 = arith.constant 0.0153159807 : f32
    %116 = vector.broadcast %cst_52 : f32 to vector<16x128xf32>
    %117 = arith.mulf %116, %105 : vector<16x128xf32>
    %cst_53 = arith.constant 0.00244872505 : f32
    %118 = vector.broadcast %cst_53 : f32 to vector<16x128xf32>
    %119 = arith.mulf %118, %103 : vector<16x128xf32>
    %120 = arith.addf %117, %119 : vector<16x128xf32>
    %cst_54 = arith.constant 0.00893280376 : f32
    %121 = vector.broadcast %cst_54 : f32 to vector<16x128xf32>
    %122 = arith.mulf %121, %107 : vector<16x128xf32>
    %123 = arith.addf %120, %122 : vector<16x128xf32>
    %cst_55 = arith.constant 0.00671523809 : f32
    %124 = vector.broadcast %cst_55 : f32 to vector<16x128xf32>
    %125 = arith.mulf %124, %105 : vector<16x128xf32>
    %cst_56 = arith.constant 0.0300685316 : f32
    %126 = vector.broadcast %cst_56 : f32 to vector<16x128xf32>
    %127 = arith.mulf %126, %103 : vector<16x128xf32>
    %128 = arith.addf %125, %127 : vector<16x128xf32>
    %cst_57 = arith.constant -0.0041288361 : f32
    %129 = vector.broadcast %cst_57 : f32 to vector<16x128xf32>
    %130 = arith.mulf %129, %107 : vector<16x128xf32>
    %131 = arith.addf %128, %130 : vector<16x128xf32>
    %c1_i32_58 = arith.constant 1 : i32
    %132 = tpu.dynamic_rotate %115 by %c1_i32_58 dim 0 : vector<16x128xf32>, i32 -> vector<16x128xf32>
    %133 = arith.mulf %132, %18 : vector<16x128xf32>
    %134 = arith.addf %123, %133 : vector<16x128xf32>
    %c15_i32_59 = arith.constant 15 : i32
    %135 = tpu.dynamic_rotate %131 by %c15_i32_59 dim 0 : vector<16x128xf32>, i32 -> vector<16x128xf32>
    %136 = arith.mulf %135, %23 : vector<16x128xf32>
    %137 = arith.addf %134, %136 : vector<16x128xf32>
    %cst_60 = arith.constant 0.000000e+00 : f32
    %138 = vector.broadcast %cst_60 : f32 to vector<16x128xf32>
    %139 = arith.maximumf %137, %138 : vector<16x128xf32>
    %140 = arith.addf %103, %139 : vector<16x128xf32>
    %c2_i32 = arith.constant 2 : i32
    %c1_i32_61 = arith.constant 1 : i32
    %141 = tpu.dynamic_rotate %140 by %c1_i32_61 dim 1 : vector<16x128xf32>, i32 -> vector<16x128xf32>
    %142 = arith.mulf %141, %8 : vector<16x128xf32>
    %c127_i32_62 = arith.constant 127 : i32
    %143 = tpu.dynamic_rotate %140 by %c127_i32_62 dim 1 : vector<16x128xf32>, i32 -> vector<16x128xf32>
    %144 = arith.mulf %143, %13 : vector<16x128xf32>
    %cst_63 = arith.constant 0.00826334767 : f32
    %145 = vector.broadcast %cst_63 : f32 to vector<16x128xf32>
    %146 = arith.mulf %145, %142 : vector<16x128xf32>
    %cst_64 = arith.constant 0.00289889518 : f32
    %147 = vector.broadcast %cst_64 : f32 to vector<16x128xf32>
    %148 = arith.mulf %147, %140 : vector<16x128xf32>
    %149 = arith.addf %146, %148 : vector<16x128xf32>
    %cst_65 = arith.constant 0.0292674396 : f32
    %150 = vector.broadcast %cst_65 : f32 to vector<16x128xf32>
    %151 = arith.mulf %150, %144 : vector<16x128xf32>
    %152 = arith.addf %149, %151 : vector<16x128xf32>
    %cst_66 = arith.constant 0.0153159807 : f32
    %153 = vector.broadcast %cst_66 : f32 to vector<16x128xf32>
    %154 = arith.mulf %153, %142 : vector<16x128xf32>
    %cst_67 = arith.constant 0.00244872505 : f32
    %155 = vector.broadcast %cst_67 : f32 to vector<16x128xf32>
    %156 = arith.mulf %155, %140 : vector<16x128xf32>
    %157 = arith.addf %154, %156 : vector<16x128xf32>
    %cst_68 = arith.constant 0.00893280376 : f32
    %158 = vector.broadcast %cst_68 : f32 to vector<16x128xf32>
    %159 = arith.mulf %158, %144 : vector<16x128xf32>
    %160 = arith.addf %157, %159 : vector<16x128xf32>
    %cst_69 = arith.constant 0.00671523809 : f32
    %161 = vector.broadcast %cst_69 : f32 to vector<16x128xf32>
    %162 = arith.mulf %161, %142 : vector<16x128xf32>
    %cst_70 = arith.constant 0.0300685316 : f32
    %163 = vector.broadcast %cst_70 : f32 to vector<16x128xf32>
    %164 = arith.mulf %163, %140 : vector<16x128xf32>
    %165 = arith.addf %162, %164 : vector<16x128xf32>
    %cst_71 = arith.constant -0.0041288361 : f32
    %166 = vector.broadcast %cst_71 : f32 to vector<16x128xf32>
    %167 = arith.mulf %166, %144 : vector<16x128xf32>
    %168 = arith.addf %165, %167 : vector<16x128xf32>
    %c1_i32_72 = arith.constant 1 : i32
    %169 = tpu.dynamic_rotate %152 by %c1_i32_72 dim 0 : vector<16x128xf32>, i32 -> vector<16x128xf32>
    %170 = arith.mulf %169, %18 : vector<16x128xf32>
    %171 = arith.addf %160, %170 : vector<16x128xf32>
    %c15_i32_73 = arith.constant 15 : i32
    %172 = tpu.dynamic_rotate %168 by %c15_i32_73 dim 0 : vector<16x128xf32>, i32 -> vector<16x128xf32>
    %173 = arith.mulf %172, %23 : vector<16x128xf32>
    %174 = arith.addf %171, %173 : vector<16x128xf32>
    %cst_74 = arith.constant 0.000000e+00 : f32
    %175 = vector.broadcast %cst_74 : f32 to vector<16x128xf32>
    %176 = arith.maximumf %174, %175 : vector<16x128xf32>
    %177 = arith.addf %140, %176 : vector<16x128xf32>
    %c1_i32_75 = arith.constant 1 : i32
    %178 = tpu.dynamic_rotate %177 by %c1_i32_75 dim 1 : vector<16x128xf32>, i32 -> vector<16x128xf32>
    %179 = arith.mulf %178, %8 : vector<16x128xf32>
    %c127_i32_76 = arith.constant 127 : i32
    %180 = tpu.dynamic_rotate %177 by %c127_i32_76 dim 1 : vector<16x128xf32>, i32 -> vector<16x128xf32>
    %181 = arith.mulf %180, %13 : vector<16x128xf32>
    %cst_77 = arith.constant -0.0170819145 : f32
    %182 = vector.broadcast %cst_77 : f32 to vector<16x128xf32>
    %183 = arith.mulf %182, %179 : vector<16x128xf32>
    %cst_78 = arith.constant -0.0510597974 : f32
    %184 = vector.broadcast %cst_78 : f32 to vector<16x128xf32>
    %185 = arith.mulf %184, %177 : vector<16x128xf32>
    %186 = arith.addf %183, %185 : vector<16x128xf32>
    %cst_79 = arith.constant 0.0130723715 : f32
    %187 = vector.broadcast %cst_79 : f32 to vector<16x128xf32>
    %188 = arith.mulf %187, %181 : vector<16x128xf32>
    %189 = arith.addf %186, %188 : vector<16x128xf32>
    %cst_80 = arith.constant 0.017288724 : f32
    %190 = vector.broadcast %cst_80 : f32 to vector<16x128xf32>
    %191 = arith.mulf %190, %179 : vector<16x128xf32>
    %cst_81 = arith.constant -1.484330e-02 : f32
    %192 = vector.broadcast %cst_81 : f32 to vector<16x128xf32>
    %193 = arith.mulf %192, %177 : vector<16x128xf32>
    %194 = arith.addf %191, %193 : vector<16x128xf32>
    %cst_82 = arith.constant 0.0453950912 : f32
    %195 = vector.broadcast %cst_82 : f32 to vector<16x128xf32>
    %196 = arith.mulf %195, %181 : vector<16x128xf32>
    %197 = arith.addf %194, %196 : vector<16x128xf32>
    %cst_83 = arith.constant -0.0290873144 : f32
    %198 = vector.broadcast %cst_83 : f32 to vector<16x128xf32>
    %199 = arith.mulf %198, %179 : vector<16x128xf32>
    %cst_84 = arith.constant 9.15170356E-4 : f32
    %200 = vector.broadcast %cst_84 : f32 to vector<16x128xf32>
    %201 = arith.mulf %200, %177 : vector<16x128xf32>
    %202 = arith.addf %199, %201 : vector<16x128xf32>
    %cst_85 = arith.constant -0.00374367693 : f32
    %203 = vector.broadcast %cst_85 : f32 to vector<16x128xf32>
    %204 = arith.mulf %203, %181 : vector<16x128xf32>
    %205 = arith.addf %202, %204 : vector<16x128xf32>
    %c1_i32_86 = arith.constant 1 : i32
    %206 = tpu.dynamic_rotate %189 by %c1_i32_86 dim 0 : vector<16x128xf32>, i32 -> vector<16x128xf32>
    %207 = arith.mulf %206, %18 : vector<16x128xf32>
    %208 = arith.addf %197, %207 : vector<16x128xf32>
    %c15_i32_87 = arith.constant 15 : i32
    %209 = tpu.dynamic_rotate %205 by %c15_i32_87 dim 0 : vector<16x128xf32>, i32 -> vector<16x128xf32>
    %210 = arith.mulf %209, %23 : vector<16x128xf32>
    %211 = arith.addf %208, %210 : vector<16x128xf32>
    %cst_88 = arith.constant 0.000000e+00 : f32
    %212 = vector.broadcast %cst_88 : f32 to vector<16x128xf32>
    %213 = arith.subf %212, %211 : vector<16x128xf32>
    %214 = math.exp %213 : vector<16x128xf32>
    %cst_89 = arith.constant 1.000000e+00 : f32
    %215 = vector.broadcast %cst_89 : f32 to vector<16x128xf32>
    %216 = arith.addf %215, %214 : vector<16x128xf32>
    %217 = tpu.reciprocal %216 {approx = true} : vector<16x128xf32> -> vector<16x128xf32>
    %218 = arith.addf %217, %27 : vector<16x128xf32>
    %cst_90 = arith.constant 9.99999974E-5 : f32
    %cst_91 = arith.constant 1.000000e+00 : f32
    %219 = vector.broadcast %cst_90 : f32 to vector<16x128xf32>
    %220 = arith.maximumf %219, %218 : vector<16x128xf32>
    %221 = vector.broadcast %cst_91 : f32 to vector<16x128xf32>
    %222 = arith.minimumf %221, %220 : vector<16x128xf32>
    %223 = tpu.reciprocal %222 {approx = true} : vector<16x128xf32> -> vector<16x128xf32>
    %224 = arith.mulf %1, %223 : vector<16x128xf32>
    %cst_92 = arith.constant 0.000000e+00 : f32
    %cst_93 = arith.constant 1.000000e+00 : f32
    %225 = vector.broadcast %cst_92 : f32 to vector<16x128xf32>
    %226 = arith.maximumf %225, %224 : vector<16x128xf32>
    %227 = vector.broadcast %cst_93 : f32 to vector<16x128xf32>
    %228 = arith.minimumf %227, %226 : vector<16x128xf32>
    %c1_i32_94 = arith.constant 1 : i32
    %229 = tpu.dynamic_rotate %228 by %c1_i32_94 dim 1 : vector<16x128xf32>, i32 -> vector<16x128xf32>
    %230 = arith.mulf %229, %8 : vector<16x128xf32>
    %c127_i32_95 = arith.constant 127 : i32
    %231 = tpu.dynamic_rotate %228 by %c127_i32_95 dim 1 : vector<16x128xf32>, i32 -> vector<16x128xf32>
    %232 = arith.mulf %231, %13 : vector<16x128xf32>
    %cst_96 = arith.constant 0.031392619 : f32
    %233 = vector.broadcast %cst_96 : f32 to vector<16x128xf32>
    %234 = arith.mulf %233, %230 : vector<16x128xf32>
    %cst_97 = arith.constant 0.0300937165 : f32
    %235 = vector.broadcast %cst_97 : f32 to vector<16x128xf32>
    %236 = arith.mulf %235, %228 : vector<16x128xf32>
    %237 = arith.addf %234, %236 : vector<16x128xf32>
    %cst_98 = arith.constant 0.00317345513 : f32
    %238 = vector.broadcast %cst_98 : f32 to vector<16x128xf32>
    %239 = arith.mulf %238, %232 : vector<16x128xf32>
    %240 = arith.addf %237, %239 : vector<16x128xf32>
    %cst_99 = arith.constant 7.745090e-03 : f32
    %241 = vector.broadcast %cst_99 : f32 to vector<16x128xf32>
    %242 = arith.mulf %241, %230 : vector<16x128xf32>
    %cst_100 = arith.constant -0.0181826074 : f32
    %243 = vector.broadcast %cst_100 : f32 to vector<16x128xf32>
    %244 = arith.mulf %243, %228 : vector<16x128xf32>
    %245 = arith.addf %242, %244 : vector<16x128xf32>
    %cst_101 = arith.constant -0.0405683964 : f32
    %246 = vector.broadcast %cst_101 : f32 to vector<16x128xf32>
    %247 = arith.mulf %246, %232 : vector<16x128xf32>
    %248 = arith.addf %245, %247 : vector<16x128xf32>
    %cst_102 = arith.constant -0.00712553645 : f32
    %249 = vector.broadcast %cst_102 : f32 to vector<16x128xf32>
    %250 = arith.mulf %249, %230 : vector<16x128xf32>
    %cst_103 = arith.constant 0.00320215966 : f32
    %251 = vector.broadcast %cst_103 : f32 to vector<16x128xf32>
    %252 = arith.mulf %251, %228 : vector<16x128xf32>
    %253 = arith.addf %250, %252 : vector<16x128xf32>
    %cst_104 = arith.constant 2.519740e-02 : f32
    %254 = vector.broadcast %cst_104 : f32 to vector<16x128xf32>
    %255 = arith.mulf %254, %232 : vector<16x128xf32>
    %256 = arith.addf %253, %255 : vector<16x128xf32>
    %c1_i32_105 = arith.constant 1 : i32
    %257 = tpu.dynamic_rotate %240 by %c1_i32_105 dim 0 : vector<16x128xf32>, i32 -> vector<16x128xf32>
    %258 = arith.mulf %257, %18 : vector<16x128xf32>
    %259 = arith.addf %248, %258 : vector<16x128xf32>
    %c15_i32_106 = arith.constant 15 : i32
    %260 = tpu.dynamic_rotate %256 by %c15_i32_106 dim 0 : vector<16x128xf32>, i32 -> vector<16x128xf32>
    %261 = arith.mulf %260, %23 : vector<16x128xf32>
    %262 = arith.addf %259, %261 : vector<16x128xf32>
    %cst_107 = arith.constant 0.000000e+00 : f32
    %263 = vector.broadcast %cst_107 : f32 to vector<16x128xf32>
    %264 = arith.maximumf %262, %263 : vector<16x128xf32>
    %c0_i32_108 = arith.constant 0 : i32
    %c1_i32_109 = arith.constant 1 : i32
    %265 = tpu.dynamic_rotate %264 by %c1_i32_109 dim 1 : vector<16x128xf32>, i32 -> vector<16x128xf32>
    %266 = arith.mulf %265, %8 : vector<16x128xf32>
    %c127_i32_110 = arith.constant 127 : i32
    %267 = tpu.dynamic_rotate %264 by %c127_i32_110 dim 1 : vector<16x128xf32>, i32 -> vector<16x128xf32>
    %268 = arith.mulf %267, %13 : vector<16x128xf32>
    %cst_111 = arith.constant -0.00786695443 : f32
    %269 = vector.broadcast %cst_111 : f32 to vector<16x128xf32>
    %270 = arith.mulf %269, %266 : vector<16x128xf32>
    %cst_112 = arith.constant -0.0061400393 : f32
    %271 = vector.broadcast %cst_112 : f32 to vector<16x128xf32>
    %272 = arith.mulf %271, %264 : vector<16x128xf32>
    %273 = arith.addf %270, %272 : vector<16x128xf32>
    %cst_113 = arith.constant -0.0212970506 : f32
    %274 = vector.broadcast %cst_113 : f32 to vector<16x128xf32>
    %275 = arith.mulf %274, %268 : vector<16x128xf32>
    %276 = arith.addf %273, %275 : vector<16x128xf32>
    %cst_114 = arith.constant -0.0288418345 : f32
    %277 = vector.broadcast %cst_114 : f32 to vector<16x128xf32>
    %278 = arith.mulf %277, %266 : vector<16x128xf32>
    %cst_115 = arith.constant -0.0346558727 : f32
    %279 = vector.broadcast %cst_115 : f32 to vector<16x128xf32>
    %280 = arith.mulf %279, %264 : vector<16x128xf32>
    %281 = arith.addf %278, %280 : vector<16x128xf32>
    %cst_116 = arith.constant 0.0396219976 : f32
    %282 = vector.broadcast %cst_116 : f32 to vector<16x128xf32>
    %283 = arith.mulf %282, %268 : vector<16x128xf32>
    %284 = arith.addf %281, %283 : vector<16x128xf32>
    %cst_117 = arith.constant -0.0103514921 : f32
    %285 = vector.broadcast %cst_117 : f32 to vector<16x128xf32>
    %286 = arith.mulf %285, %266 : vector<16x128xf32>
    %cst_118 = arith.constant -0.00889768172 : f32
    %287 = vector.broadcast %cst_118 : f32 to vector<16x128xf32>
    %288 = arith.mulf %287, %264 : vector<16x128xf32>
    %289 = arith.addf %286, %288 : vector<16x128xf32>
    %cst_119 = arith.constant -0.0254453961 : f32
    %290 = vector.broadcast %cst_119 : f32 to vector<16x128xf32>
    %291 = arith.mulf %290, %268 : vector<16x128xf32>
    %292 = arith.addf %289, %291 : vector<16x128xf32>
    %c1_i32_120 = arith.constant 1 : i32
    %293 = tpu.dynamic_rotate %276 by %c1_i32_120 dim 0 : vector<16x128xf32>, i32 -> vector<16x128xf32>
    %294 = arith.mulf %293, %18 : vector<16x128xf32>
    %295 = arith.addf %284, %294 : vector<16x128xf32>
    %c15_i32_121 = arith.constant 15 : i32
    %296 = tpu.dynamic_rotate %292 by %c15_i32_121 dim 0 : vector<16x128xf32>, i32 -> vector<16x128xf32>
    %297 = arith.mulf %296, %23 : vector<16x128xf32>
    %298 = arith.addf %295, %297 : vector<16x128xf32>
    %cst_122 = arith.constant 0.000000e+00 : f32
    %299 = vector.broadcast %cst_122 : f32 to vector<16x128xf32>
    %300 = arith.maximumf %298, %299 : vector<16x128xf32>
    %c1_i32_123 = arith.constant 1 : i32
    %301 = tpu.dynamic_rotate %300 by %c1_i32_123 dim 1 : vector<16x128xf32>, i32 -> vector<16x128xf32>
    %302 = arith.mulf %301, %8 : vector<16x128xf32>
    %c127_i32_124 = arith.constant 127 : i32
    %303 = tpu.dynamic_rotate %300 by %c127_i32_124 dim 1 : vector<16x128xf32>, i32 -> vector<16x128xf32>
    %304 = arith.mulf %303, %13 : vector<16x128xf32>
    %cst_125 = arith.constant -0.0324730575 : f32
    %305 = vector.broadcast %cst_125 : f32 to vector<16x128xf32>
    %306 = arith.mulf %305, %302 : vector<16x128xf32>
    %cst_126 = arith.constant -0.00428052293 : f32
    %307 = vector.broadcast %cst_126 : f32 to vector<16x128xf32>
    %308 = arith.mulf %307, %300 : vector<16x128xf32>
    %309 = arith.addf %306, %308 : vector<16x128xf32>
    %cst_127 = arith.constant -0.0180175826 : f32
    %310 = vector.broadcast %cst_127 : f32 to vector<16x128xf32>
    %311 = arith.mulf %310, %304 : vector<16x128xf32>
    %312 = arith.addf %309, %311 : vector<16x128xf32>
    %cst_128 = arith.constant 0.00778482202 : f32
    %313 = vector.broadcast %cst_128 : f32 to vector<16x128xf32>
    %314 = arith.mulf %313, %302 : vector<16x128xf32>
    %cst_129 = arith.constant -0.0102778533 : f32
    %315 = vector.broadcast %cst_129 : f32 to vector<16x128xf32>
    %316 = arith.mulf %315, %300 : vector<16x128xf32>
    %317 = arith.addf %314, %316 : vector<16x128xf32>
    %cst_130 = arith.constant -0.0237553678 : f32
    %318 = vector.broadcast %cst_130 : f32 to vector<16x128xf32>
    %319 = arith.mulf %318, %304 : vector<16x128xf32>
    %320 = arith.addf %317, %319 : vector<16x128xf32>
    %cst_131 = arith.constant -5.67051466E-4 : f32
    %321 = vector.broadcast %cst_131 : f32 to vector<16x128xf32>
    %322 = arith.mulf %321, %302 : vector<16x128xf32>
    %cst_132 = arith.constant 0.0086184172 : f32
    %323 = vector.broadcast %cst_132 : f32 to vector<16x128xf32>
    %324 = arith.mulf %323, %300 : vector<16x128xf32>
    %325 = arith.addf %322, %324 : vector<16x128xf32>
    %cst_133 = arith.constant 0.00133838563 : f32
    %326 = vector.broadcast %cst_133 : f32 to vector<16x128xf32>
    %327 = arith.mulf %326, %304 : vector<16x128xf32>
    %328 = arith.addf %325, %327 : vector<16x128xf32>
    %c1_i32_134 = arith.constant 1 : i32
    %329 = tpu.dynamic_rotate %312 by %c1_i32_134 dim 0 : vector<16x128xf32>, i32 -> vector<16x128xf32>
    %330 = arith.mulf %329, %18 : vector<16x128xf32>
    %331 = arith.addf %320, %330 : vector<16x128xf32>
    %c15_i32_135 = arith.constant 15 : i32
    %332 = tpu.dynamic_rotate %328 by %c15_i32_135 dim 0 : vector<16x128xf32>, i32 -> vector<16x128xf32>
    %333 = arith.mulf %332, %23 : vector<16x128xf32>
    %334 = arith.addf %331, %333 : vector<16x128xf32>
    %cst_136 = arith.constant 0.000000e+00 : f32
    %335 = vector.broadcast %cst_136 : f32 to vector<16x128xf32>
    %336 = arith.maximumf %334, %335 : vector<16x128xf32>
    %337 = arith.addf %264, %336 : vector<16x128xf32>
    %c1_i32_137 = arith.constant 1 : i32
    %c1_i32_138 = arith.constant 1 : i32
    %338 = tpu.dynamic_rotate %337 by %c1_i32_138 dim 1 : vector<16x128xf32>, i32 -> vector<16x128xf32>
    %339 = arith.mulf %338, %8 : vector<16x128xf32>
    %c127_i32_139 = arith.constant 127 : i32
    %340 = tpu.dynamic_rotate %337 by %c127_i32_139 dim 1 : vector<16x128xf32>, i32 -> vector<16x128xf32>
    %341 = arith.mulf %340, %13 : vector<16x128xf32>
    %cst_140 = arith.constant -0.00786695443 : f32
    %342 = vector.broadcast %cst_140 : f32 to vector<16x128xf32>
    %343 = arith.mulf %342, %339 : vector<16x128xf32>
    %cst_141 = arith.constant -0.0061400393 : f32
    %344 = vector.broadcast %cst_141 : f32 to vector<16x128xf32>
    %345 = arith.mulf %344, %337 : vector<16x128xf32>
    %346 = arith.addf %343, %345 : vector<16x128xf32>
    %cst_142 = arith.constant -0.0212970506 : f32
    %347 = vector.broadcast %cst_142 : f32 to vector<16x128xf32>
    %348 = arith.mulf %347, %341 : vector<16x128xf32>
    %349 = arith.addf %346, %348 : vector<16x128xf32>
    %cst_143 = arith.constant -0.0288418345 : f32
    %350 = vector.broadcast %cst_143 : f32 to vector<16x128xf32>
    %351 = arith.mulf %350, %339 : vector<16x128xf32>
    %cst_144 = arith.constant -0.0346558727 : f32
    %352 = vector.broadcast %cst_144 : f32 to vector<16x128xf32>
    %353 = arith.mulf %352, %337 : vector<16x128xf32>
    %354 = arith.addf %351, %353 : vector<16x128xf32>
    %cst_145 = arith.constant 0.0396219976 : f32
    %355 = vector.broadcast %cst_145 : f32 to vector<16x128xf32>
    %356 = arith.mulf %355, %341 : vector<16x128xf32>
    %357 = arith.addf %354, %356 : vector<16x128xf32>
    %cst_146 = arith.constant -0.0103514921 : f32
    %358 = vector.broadcast %cst_146 : f32 to vector<16x128xf32>
    %359 = arith.mulf %358, %339 : vector<16x128xf32>
    %cst_147 = arith.constant -0.00889768172 : f32
    %360 = vector.broadcast %cst_147 : f32 to vector<16x128xf32>
    %361 = arith.mulf %360, %337 : vector<16x128xf32>
    %362 = arith.addf %359, %361 : vector<16x128xf32>
    %cst_148 = arith.constant -0.0254453961 : f32
    %363 = vector.broadcast %cst_148 : f32 to vector<16x128xf32>
    %364 = arith.mulf %363, %341 : vector<16x128xf32>
    %365 = arith.addf %362, %364 : vector<16x128xf32>
    %c1_i32_149 = arith.constant 1 : i32
    %366 = tpu.dynamic_rotate %349 by %c1_i32_149 dim 0 : vector<16x128xf32>, i32 -> vector<16x128xf32>
    %367 = arith.mulf %366, %18 : vector<16x128xf32>
    %368 = arith.addf %357, %367 : vector<16x128xf32>
    %c15_i32_150 = arith.constant 15 : i32
    %369 = tpu.dynamic_rotate %365 by %c15_i32_150 dim 0 : vector<16x128xf32>, i32 -> vector<16x128xf32>
    %370 = arith.mulf %369, %23 : vector<16x128xf32>
    %371 = arith.addf %368, %370 : vector<16x128xf32>
    %cst_151 = arith.constant 0.000000e+00 : f32
    %372 = vector.broadcast %cst_151 : f32 to vector<16x128xf32>
    %373 = arith.maximumf %371, %372 : vector<16x128xf32>
    %c1_i32_152 = arith.constant 1 : i32
    %374 = tpu.dynamic_rotate %373 by %c1_i32_152 dim 1 : vector<16x128xf32>, i32 -> vector<16x128xf32>
    %375 = arith.mulf %374, %8 : vector<16x128xf32>
    %c127_i32_153 = arith.constant 127 : i32
    %376 = tpu.dynamic_rotate %373 by %c127_i32_153 dim 1 : vector<16x128xf32>, i32 -> vector<16x128xf32>
    %377 = arith.mulf %376, %13 : vector<16x128xf32>
    %cst_154 = arith.constant -0.0324730575 : f32
    %378 = vector.broadcast %cst_154 : f32 to vector<16x128xf32>
    %379 = arith.mulf %378, %375 : vector<16x128xf32>
    %cst_155 = arith.constant -0.00428052293 : f32
    %380 = vector.broadcast %cst_155 : f32 to vector<16x128xf32>
    %381 = arith.mulf %380, %373 : vector<16x128xf32>
    %382 = arith.addf %379, %381 : vector<16x128xf32>
    %cst_156 = arith.constant -0.0180175826 : f32
    %383 = vector.broadcast %cst_156 : f32 to vector<16x128xf32>
    %384 = arith.mulf %383, %377 : vector<16x128xf32>
    %385 = arith.addf %382, %384 : vector<16x128xf32>
    %cst_157 = arith.constant 0.00778482202 : f32
    %386 = vector.broadcast %cst_157 : f32 to vector<16x128xf32>
    %387 = arith.mulf %386, %375 : vector<16x128xf32>
    %cst_158 = arith.constant -0.0102778533 : f32
    %388 = vector.broadcast %cst_158 : f32 to vector<16x128xf32>
    %389 = arith.mulf %388, %373 : vector<16x128xf32>
    %390 = arith.addf %387, %389 : vector<16x128xf32>
    %cst_159 = arith.constant -0.0237553678 : f32
    %391 = vector.broadcast %cst_159 : f32 to vector<16x128xf32>
    %392 = arith.mulf %391, %377 : vector<16x128xf32>
    %393 = arith.addf %390, %392 : vector<16x128xf32>
    %cst_160 = arith.constant -5.67051466E-4 : f32
    %394 = vector.broadcast %cst_160 : f32 to vector<16x128xf32>
    %395 = arith.mulf %394, %375 : vector<16x128xf32>
    %cst_161 = arith.constant 0.0086184172 : f32
    %396 = vector.broadcast %cst_161 : f32 to vector<16x128xf32>
    %397 = arith.mulf %396, %373 : vector<16x128xf32>
    %398 = arith.addf %395, %397 : vector<16x128xf32>
    %cst_162 = arith.constant 0.00133838563 : f32
    %399 = vector.broadcast %cst_162 : f32 to vector<16x128xf32>
    %400 = arith.mulf %399, %377 : vector<16x128xf32>
    %401 = arith.addf %398, %400 : vector<16x128xf32>
    %c1_i32_163 = arith.constant 1 : i32
    %402 = tpu.dynamic_rotate %385 by %c1_i32_163 dim 0 : vector<16x128xf32>, i32 -> vector<16x128xf32>
    %403 = arith.mulf %402, %18 : vector<16x128xf32>
    %404 = arith.addf %393, %403 : vector<16x128xf32>
    %c15_i32_164 = arith.constant 15 : i32
    %405 = tpu.dynamic_rotate %401 by %c15_i32_164 dim 0 : vector<16x128xf32>, i32 -> vector<16x128xf32>
    %406 = arith.mulf %405, %23 : vector<16x128xf32>
    %407 = arith.addf %404, %406 : vector<16x128xf32>
    %cst_165 = arith.constant 0.000000e+00 : f32
    %408 = vector.broadcast %cst_165 : f32 to vector<16x128xf32>
    %409 = arith.maximumf %407, %408 : vector<16x128xf32>
    %410 = arith.addf %337, %409 : vector<16x128xf32>
    %c2_i32_166 = arith.constant 2 : i32
    %c1_i32_167 = arith.constant 1 : i32
    %411 = tpu.dynamic_rotate %410 by %c1_i32_167 dim 1 : vector<16x128xf32>, i32 -> vector<16x128xf32>
    %412 = arith.mulf %411, %8 : vector<16x128xf32>
    %c127_i32_168 = arith.constant 127 : i32
    %413 = tpu.dynamic_rotate %410 by %c127_i32_168 dim 1 : vector<16x128xf32>, i32 -> vector<16x128xf32>
    %414 = arith.mulf %413, %13 : vector<16x128xf32>
    %cst_169 = arith.constant -0.00786695443 : f32
    %415 = vector.broadcast %cst_169 : f32 to vector<16x128xf32>
    %416 = arith.mulf %415, %412 : vector<16x128xf32>
    %cst_170 = arith.constant -0.0061400393 : f32
    %417 = vector.broadcast %cst_170 : f32 to vector<16x128xf32>
    %418 = arith.mulf %417, %410 : vector<16x128xf32>
    %419 = arith.addf %416, %418 : vector<16x128xf32>
    %cst_171 = arith.constant -0.0212970506 : f32
    %420 = vector.broadcast %cst_171 : f32 to vector<16x128xf32>
    %421 = arith.mulf %420, %414 : vector<16x128xf32>
    %422 = arith.addf %419, %421 : vector<16x128xf32>
    %cst_172 = arith.constant -0.0288418345 : f32
    %423 = vector.broadcast %cst_172 : f32 to vector<16x128xf32>
    %424 = arith.mulf %423, %412 : vector<16x128xf32>
    %cst_173 = arith.constant -0.0346558727 : f32
    %425 = vector.broadcast %cst_173 : f32 to vector<16x128xf32>
    %426 = arith.mulf %425, %410 : vector<16x128xf32>
    %427 = arith.addf %424, %426 : vector<16x128xf32>
    %cst_174 = arith.constant 0.0396219976 : f32
    %428 = vector.broadcast %cst_174 : f32 to vector<16x128xf32>
    %429 = arith.mulf %428, %414 : vector<16x128xf32>
    %430 = arith.addf %427, %429 : vector<16x128xf32>
    %cst_175 = arith.constant -0.0103514921 : f32
    %431 = vector.broadcast %cst_175 : f32 to vector<16x128xf32>
    %432 = arith.mulf %431, %412 : vector<16x128xf32>
    %cst_176 = arith.constant -0.00889768172 : f32
    %433 = vector.broadcast %cst_176 : f32 to vector<16x128xf32>
    %434 = arith.mulf %433, %410 : vector<16x128xf32>
    %435 = arith.addf %432, %434 : vector<16x128xf32>
    %cst_177 = arith.constant -0.0254453961 : f32
    %436 = vector.broadcast %cst_177 : f32 to vector<16x128xf32>
    %437 = arith.mulf %436, %414 : vector<16x128xf32>
    %438 = arith.addf %435, %437 : vector<16x128xf32>
    %c1_i32_178 = arith.constant 1 : i32
    %439 = tpu.dynamic_rotate %422 by %c1_i32_178 dim 0 : vector<16x128xf32>, i32 -> vector<16x128xf32>
    %440 = arith.mulf %439, %18 : vector<16x128xf32>
    %441 = arith.addf %430, %440 : vector<16x128xf32>
    %c15_i32_179 = arith.constant 15 : i32
    %442 = tpu.dynamic_rotate %438 by %c15_i32_179 dim 0 : vector<16x128xf32>, i32 -> vector<16x128xf32>
    %443 = arith.mulf %442, %23 : vector<16x128xf32>
    %444 = arith.addf %441, %443 : vector<16x128xf32>
    %cst_180 = arith.constant 0.000000e+00 : f32
    %445 = vector.broadcast %cst_180 : f32 to vector<16x128xf32>
    %446 = arith.maximumf %444, %445 : vector<16x128xf32>
    %c1_i32_181 = arith.constant 1 : i32
    %447 = tpu.dynamic_rotate %446 by %c1_i32_181 dim 1 : vector<16x128xf32>, i32 -> vector<16x128xf32>
    %448 = arith.mulf %447, %8 : vector<16x128xf32>
    %c127_i32_182 = arith.constant 127 : i32
    %449 = tpu.dynamic_rotate %446 by %c127_i32_182 dim 1 : vector<16x128xf32>, i32 -> vector<16x128xf32>
    %450 = arith.mulf %449, %13 : vector<16x128xf32>
    %cst_183 = arith.constant -0.0324730575 : f32
    %451 = vector.broadcast %cst_183 : f32 to vector<16x128xf32>
    %452 = arith.mulf %451, %448 : vector<16x128xf32>
    %cst_184 = arith.constant -0.00428052293 : f32
    %453 = vector.broadcast %cst_184 : f32 to vector<16x128xf32>
    %454 = arith.mulf %453, %446 : vector<16x128xf32>
    %455 = arith.addf %452, %454 : vector<16x128xf32>
    %cst_185 = arith.constant -0.0180175826 : f32
    %456 = vector.broadcast %cst_185 : f32 to vector<16x128xf32>
    %457 = arith.mulf %456, %450 : vector<16x128xf32>
    %458 = arith.addf %455, %457 : vector<16x128xf32>
    %cst_186 = arith.constant 0.00778482202 : f32
    %459 = vector.broadcast %cst_186 : f32 to vector<16x128xf32>
    %460 = arith.mulf %459, %448 : vector<16x128xf32>
    %cst_187 = arith.constant -0.0102778533 : f32
    %461 = vector.broadcast %cst_187 : f32 to vector<16x128xf32>
    %462 = arith.mulf %461, %446 : vector<16x128xf32>
    %463 = arith.addf %460, %462 : vector<16x128xf32>
    %cst_188 = arith.constant -0.0237553678 : f32
    %464 = vector.broadcast %cst_188 : f32 to vector<16x128xf32>
    %465 = arith.mulf %464, %450 : vector<16x128xf32>
    %466 = arith.addf %463, %465 : vector<16x128xf32>
    %cst_189 = arith.constant -5.67051466E-4 : f32
    %467 = vector.broadcast %cst_189 : f32 to vector<16x128xf32>
    %468 = arith.mulf %467, %448 : vector<16x128xf32>
    %cst_190 = arith.constant 0.0086184172 : f32
    %469 = vector.broadcast %cst_190 : f32 to vector<16x128xf32>
    %470 = arith.mulf %469, %446 : vector<16x128xf32>
    %471 = arith.addf %468, %470 : vector<16x128xf32>
    %cst_191 = arith.constant 0.00133838563 : f32
    %472 = vector.broadcast %cst_191 : f32 to vector<16x128xf32>
    %473 = arith.mulf %472, %450 : vector<16x128xf32>
    %474 = arith.addf %471, %473 : vector<16x128xf32>
    %c1_i32_192 = arith.constant 1 : i32
    %475 = tpu.dynamic_rotate %458 by %c1_i32_192 dim 0 : vector<16x128xf32>, i32 -> vector<16x128xf32>
    %476 = arith.mulf %475, %18 : vector<16x128xf32>
    %477 = arith.addf %466, %476 : vector<16x128xf32>
    %c15_i32_193 = arith.constant 15 : i32
    %478 = tpu.dynamic_rotate %474 by %c15_i32_193 dim 0 : vector<16x128xf32>, i32 -> vector<16x128xf32>
    %479 = arith.mulf %478, %23 : vector<16x128xf32>
    %480 = arith.addf %477, %479 : vector<16x128xf32>
    %cst_194 = arith.constant 0.000000e+00 : f32
    %481 = vector.broadcast %cst_194 : f32 to vector<16x128xf32>
    %482 = arith.maximumf %480, %481 : vector<16x128xf32>
    %483 = arith.addf %410, %482 : vector<16x128xf32>
    %c1_i32_195 = arith.constant 1 : i32
    %484 = tpu.dynamic_rotate %483 by %c1_i32_195 dim 1 : vector<16x128xf32>, i32 -> vector<16x128xf32>
    %485 = arith.mulf %484, %8 : vector<16x128xf32>
    %c127_i32_196 = arith.constant 127 : i32
    %486 = tpu.dynamic_rotate %483 by %c127_i32_196 dim 1 : vector<16x128xf32>, i32 -> vector<16x128xf32>
    %487 = arith.mulf %486, %13 : vector<16x128xf32>
    %cst_197 = arith.constant -0.0126864417 : f32
    %488 = vector.broadcast %cst_197 : f32 to vector<16x128xf32>
    %489 = arith.mulf %488, %485 : vector<16x128xf32>
    %cst_198 = arith.constant -0.00725482311 : f32
    %490 = vector.broadcast %cst_198 : f32 to vector<16x128xf32>
    %491 = arith.mulf %490, %483 : vector<16x128xf32>
    %492 = arith.addf %489, %491 : vector<16x128xf32>
    %cst_199 = arith.constant -0.0134492088 : f32
    %493 = vector.broadcast %cst_199 : f32 to vector<16x128xf32>
    %494 = arith.mulf %493, %487 : vector<16x128xf32>
    %495 = arith.addf %492, %494 : vector<16x128xf32>
    %cst_200 = arith.constant -0.00719106337 : f32
    %496 = vector.broadcast %cst_200 : f32 to vector<16x128xf32>
    %497 = arith.mulf %496, %485 : vector<16x128xf32>
    %cst_201 = arith.constant -0.0162629262 : f32
    %498 = vector.broadcast %cst_201 : f32 to vector<16x128xf32>
    %499 = arith.mulf %498, %483 : vector<16x128xf32>
    %500 = arith.addf %497, %499 : vector<16x128xf32>
    %cst_202 = arith.constant -0.0345256515 : f32
    %501 = vector.broadcast %cst_202 : f32 to vector<16x128xf32>
    %502 = arith.mulf %501, %487 : vector<16x128xf32>
    %503 = arith.addf %500, %502 : vector<16x128xf32>
    %cst_203 = arith.constant 0.00354852295 : f32
    %504 = vector.broadcast %cst_203 : f32 to vector<16x128xf32>
    %505 = arith.mulf %504, %485 : vector<16x128xf32>
    %cst_204 = arith.constant -0.00803561881 : f32
    %506 = vector.broadcast %cst_204 : f32 to vector<16x128xf32>
    %507 = arith.mulf %506, %483 : vector<16x128xf32>
    %508 = arith.addf %505, %507 : vector<16x128xf32>
    %cst_205 = arith.constant -0.0326039679 : f32
    %509 = vector.broadcast %cst_205 : f32 to vector<16x128xf32>
    %510 = arith.mulf %509, %487 : vector<16x128xf32>
    %511 = arith.addf %508, %510 : vector<16x128xf32>
    %c1_i32_206 = arith.constant 1 : i32
    %512 = tpu.dynamic_rotate %495 by %c1_i32_206 dim 0 : vector<16x128xf32>, i32 -> vector<16x128xf32>
    %513 = arith.mulf %512, %18 : vector<16x128xf32>
    %514 = arith.addf %503, %513 : vector<16x128xf32>
    %c15_i32_207 = arith.constant 15 : i32
    %515 = tpu.dynamic_rotate %511 by %c15_i32_207 dim 0 : vector<16x128xf32>, i32 -> vector<16x128xf32>
    %516 = arith.mulf %515, %23 : vector<16x128xf32>
    %517 = arith.addf %514, %516 : vector<16x128xf32>
    %cst_208 = arith.constant 0.000000e+00 : f32
    %518 = vector.broadcast %cst_208 : f32 to vector<16x128xf32>
    %519 = arith.subf %518, %517 : vector<16x128xf32>
    %520 = math.exp %519 : vector<16x128xf32>
    %cst_209 = arith.constant 1.000000e+00 : f32
    %521 = vector.broadcast %cst_209 : f32 to vector<16x128xf32>
    %522 = arith.addf %521, %520 : vector<16x128xf32>
    %523 = tpu.reciprocal %522 {approx = true} : vector<16x128xf32> -> vector<16x128xf32>
    %524 = arith.subf %228, %523 : vector<16x128xf32>
    %c1_i32_210 = arith.constant 1 : i32
    %525 = arith.addi %arg1, %c1_i32_210 : i32
    %c3_i32 = arith.constant 3 : i32
    %526 = arith.cmpi slt, %525, %c3_i32 : i32
    %527 = arith.extui %526 : i1 to i32
    %c0_i32_211 = arith.constant 0 : i32
    %528 = arith.cmpi ne, %527, %c0_i32_211 : i32
    scf.if %528 {
      %539 = arith.addf %1, %524 : vector<16x128xf32>
      %c0_224 = arith.constant 0 : index
      %c0_225 = arith.constant 0 : index
      %540 = vector.load %arg7[%c0_224, %c0_225] : memref<16x128xf32, #tpu.memory_space<vmem>>, vector<16x128xf32>
      tpu.vector_store %arg7[%c0_224, %c0_225], %539 {strides = array<i32>} : memref<16x128xf32, #tpu.memory_space<vmem>>, vector<16x128xf32>,
    } else {
    }
    %c0_212 = arith.constant 0 : index
    %c0_213 = arith.constant 0 : index
    %c0_214 = arith.constant 0 : index
    %c0_215 = arith.constant 0 : index
    %529 = vector.load %arg3[%c0_212, %c0_213, %c0_214, %c0_215] : memref<1x1x16x128xf32, #tpu.memory_space<vmem>>, vector<1x1x16x128xf32>
    %530 = vector.shape_cast %529 : vector<1x1x16x128xf32> to vector<16x128xf32>
    %531 = vector.shape_cast %222 : vector<16x128xf32> to vector<1x1x16x128xf32>
    tpu.vector_store %arg3[%c0_212, %c0_213, %c0_214, %c0_215], %531 {strides = array<i32>} : memref<1x1x16x128xf32, #tpu.memory_space<vmem>>, vector<1x1x16x128xf32>,
    %c0_216 = arith.constant 0 : index
    %c0_217 = arith.constant 0 : index
    %c0_218 = arith.constant 0 : index
    %c0_219 = arith.constant 0 : index
    %532 = vector.load %arg4[%c0_216, %c0_217, %c0_218, %c0_219] : memref<1x1x16x128xf32, #tpu.memory_space<vmem>>, vector<1x1x16x128xf32>
    %533 = vector.shape_cast %532 : vector<1x1x16x128xf32> to vector<16x128xf32>
    %534 = vector.shape_cast %228 : vector<16x128xf32> to vector<1x1x16x128xf32>
    tpu.vector_store %arg4[%c0_216, %c0_217, %c0_218, %c0_219], %534 {strides = array<i32>} : memref<1x1x16x128xf32, #tpu.memory_space<vmem>>, vector<1x1x16x128xf32>,
    %535 = math.absf %524 : vector<16x128xf32>
    %c0_220 = arith.constant 0 : index
    %c0_221 = arith.constant 0 : index
    %c0_222 = arith.constant 0 : index
    %c0_223 = arith.constant 0 : index
    %536 = vector.load %arg6[%c0_220, %c0_221, %c0_222, %c0_223] : memref<1x1x16x128xf32, #tpu.memory_space<vmem>>, vector<1x1x16x128xf32>
    %537 = vector.shape_cast %536 : vector<1x1x16x128xf32> to vector<16x128xf32>
    %538 = vector.shape_cast %535 : vector<16x128xf32> to vector<1x1x16x128xf32>
    tpu.vector_store %arg6[%c0_220, %c0_221, %c0_222, %c0_223], %538 {strides = array<i32>} : memref<1x1x16x128xf32, #tpu.memory_space<vmem>>, vector<1x1x16x128xf32>,
    return
  }
  func.func @transform_0(%arg0: i32, %arg1: i32) -> (i32, i32, i32) {
    %c0_i32 = arith.constant 0 : i32
    %c0_i32_0 = arith.constant 0 : i32
    %c0_i32_1 = arith.constant 0 : i32
    return %arg0, %c0_i32, %c0_i32_0 : i32, i32, i32
  }
  func.func @transform_1(%arg0: i32, %arg1: i32) -> (i32, i32, i32, i32) {
    %c0_i32 = arith.constant 0 : i32
    %c0_i32_0 = arith.constant 0 : i32
    %c0_i32_1 = arith.constant 0 : i32
    return %arg0, %arg1, %c0_i32, %c0_i32_0 : i32, i32, i32, i32
  }
  func.func @transform_2(%arg0: i32, %arg1: i32) -> (i32, i32, i32, i32) {
    %c0_i32 = arith.constant 0 : i32
    %c0_i32_0 = arith.constant 0 : i32
    %c0_i32_1 = arith.constant 0 : i32
    return %arg0, %arg1, %c0_i32, %c0_i32_0 : i32, i32, i32, i32
  }
  func.func @transform_3(%arg0: i32, %arg1: i32) -> (i32, i32, i32, i32) {
    %c0_i32 = arith.constant 0 : i32
    %c0_i32_0 = arith.constant 0 : i32
    %c0_i32_1 = arith.constant 0 : i32
    return %arg0, %arg1, %c0_i32, %c0_i32_0 : i32, i32, i32, i32
  }
  func.func @transform_4(%arg0: i32, %arg1: i32) -> (i32, i32, i32, i32) {
    %c0_i32 = arith.constant 0 : i32
    %c0_i32_0 = arith.constant 0 : i32
    %c0_i32_1 = arith.constant 0 : i32
    return %arg0, %arg1, %c0_i32, %c0_i32_0 : i32, i32, i32, i32
  }
}

</mosaic_0001>

<llo_original>
// kernel: tpu_custom_call.1
$region0: #{tpu_custom_call.1}
  #allocation0 [shape = 'u32[]', space=smem, size = 0x4, offset = 0x4, fixed_abs, tag = 'smem constant byte address 0x4 - core index']
  #allocation1 [shape = 'u32[144,128]{1,0:T(1,128)}', space=vmem, size = 0x12000, scoped, tag = 'internal scratch']
  #allocation2 [shape = 'f32[16,128]{1,0:T(8,128)}', space=vmem, size = 0x2000, scoped, tag = 'scratch operand']
  %s0 = inlined_call_operand.hbm [shape: f32[2,16,128], index: 0, kind: input, shape index: {}]
  %s1 = inlined_call_operand.hbm [shape: f32[2,3,16,128], index: 1, kind: output, shape index: {0}]
  %s2 = inlined_call_operand.hbm [shape: f32[2,3,16,128], index: 2, kind: output, shape index: {1}]
  %s3 = inlined_call_operand.hbm [shape: f32[2,3,16,128], index: 3, kind: output, shape index: {2}]
  %s4 = inlined_call_operand.hbm [shape: f32[2,3,16,128], index: 4, kind: output, shape index: {3}]
  %5 = xla_tuple %s1, %s2, %s3, %s4
  %s6 = sld [smem:[#allocation0]]
  $region73: #{tpu_custom_call.1} parent=0
    _
  %s8 = ssub.s32 1, %s6
  %s9 = scalar_select 0, %s8, %s6
  $region1: #{tpu_custom_call.1} parent=0
    #allocation3 [shape = 'u8[16384]{0}', space=vmem, size = 0x4000, scoped, tag = 'input window, operand 0']
    #allocation4 [shape = 's32[2]{0}', space=sflag, size = 0x8, scoped, tag = 'scoped memory for tpu_custom_call.1']
    #allocation5 [shape = 's32[2]{0}', space=sflag, size = 0x8, scoped, tag = 'scoped memory for tpu_custom_call.1']
    #allocation6 [shape = 'u8[16384]{0}', space=vmem, size = 0x4000, scoped, tag = 'output window, operand 0']
    #allocation7 [shape = 'u8[16384]{0}', space=vmem, size = 0x4000, scoped, tag = 'output window, operand 1']
    #allocation8 [shape = 's32[2]{0}', space=sflag, size = 0x8, scoped, tag = 'scoped memory for tpu_custom_call.1']
    #allocation9 [shape = 'u8[16384]{0}', space=vmem, size = 0x4000, scoped, tag = 'output window, operand 2']
    #allocation10 [shape = 'u8[16384]{0}', space=vmem, size = 0x4000, scoped, tag = 'output window, operand 3']
    #allocation11 [shape = 's32[2]{0}', space=sflag, size = 0x8, scoped, tag = 'scoped memory for tpu_custom_call.1']
    %10 = vsyncpa [#allocation4], 0
    %s11 = scalar_lea.sflag [#allocation4], 1
    %12 = vsyncpa %s11, 0
    %13 = vsyncpa [#allocation5], 0
    %s14 = scalar_lea.sflag [#allocation5], 1
    %15 = vsyncpa %s14, 0
    %16 = vsyncpa [#allocation8], 0
    %s17 = scalar_lea.sflag [#allocation8], 1
    %18 = vsyncpa %s17, 0
    %19 = vsyncpa [#allocation11], 0
    %s20 = scalar_lea.sflag [#allocation11], 1
    %21 = vsyncpa %s20, 0
    loop: start=0, step=1, limit=8
    $region2: #{tpu_custom_call.1} parent=1 // loop_pre_header
      _
    $region3: #{tpu_custom_call.1} parent=1 // loop_header
      %s23 = sphi 0, %s27
      %p24 = scmp.ge.s32.totalorder %s23, 8
      %s30 = sphi 0, %s42
      %s31 = sphi 0, %s38
      %s32 = sphi 0, %s30
      %s33 = sphi 0, %s31
      %s34 = sphi 0, %s32
      %s35 = sphi 0, %s33
      %s45 = sphi 0, %s47
      %s48 = sphi 0, %s45
      %s49 = sphi 0, %s48
      %s65 = sphi 0, %s49
      %s73 = sphi 0, %s75
      %s76 = sphi 0, %s73
      %s77 = sphi 0, %s76
      %s93 = sphi 0, %s77
      %s101 = sphi 0, %s103
      %s104 = sphi 0, %s101
      %s105 = sphi 0, %s104
      %s121 = sphi 0, %s105
      %s129 = sphi 0, %s131
      %s132 = sphi 0, %s129
      %s133 = sphi 0, %s132
      %s149 = sphi 0, %s133
      %s157 = sphi 0, %s159
      %s160 = sphi 0, %s157
      %s161 = sphi 0, %s160
      %s177 = sphi 0, %s161
    $region4: #{tpu_custom_call.1} parent=1 // loop_header_branch
      %26 = sbr.rel (%p24) target = $region8
    $region5: #{tpu_custom_call.1} parent=1 // loop_body
      %s28 = ssub.s32 %s23, 1
      %s29 = ssub.s32 %s23, 2
      %s36 = sadd.s32 1, %s31
      %p37 = scmp.ge.s32.totalorder %s36, 3
      %s38 = scalar_select %p37, 0, %s36
      %s39 = sadd.s32 1, %s30
      %s40 = scalar_select %p37, %s39, %s30
      %p41 = scmp.ge.s32.totalorder %s40, 2
      %s42 = scalar_select %p41, 0, %s40
      %s43 = ssub.s32 %s30, %s42
      %p44 = scmp.eq.s32.totalorder %s43, 0
      %s46 = sadd.s32 %s45, 1
      %s47 = scalar_select %p44, %s45, %s46
      %p50 = pneg %p44
      %p51 = scmp.eq.s32.totalorder %s23, 5
      %p52 = por %p50, %p51
      %p53 = scmp.ne.s32.totalorder %s45, %s48
      %p54 = scmp.eq.s32.totalorder %s23, 0
      %p55 = por %p53, %p54
      %p56 = scmp.ne.s32.totalorder %s45, %s48
      %p57 = scmp.eq.s32.totalorder %s28, 5
      %p58 = por %p56, %p57
      %p59 = scmp.ne.s32.totalorder %s48, %s49
      %p60 = scmp.eq.s32.totalorder %s28, 0
      %p61 = por %p59, %p60
      %p62 = scmp.ne.s32.totalorder %s48, %s49
      %p63 = scmp.eq.s32.totalorder %s29, 5
      %p64 = por %p62, %p63
      %p66 = scmp.ne.s32.totalorder %s49, %s65
      %p67 = scmp.eq.s32.totalorder %s29, 0
      %p68 = por %p66, %p67
      %s69 = ssub.s32 %s30, %s42
      %s70 = ssub.s32 %s31, %s38
      %s71 = sor.u32 %s69, %s70
      %p72 = scmp.eq.s32.totalorder %s71, 0
      %s74 = sadd.s32 %s73, 1
      %s75 = scalar_select %p72, %s73, %s74
      %p78 = pneg %p72
      %p79 = scmp.eq.s32.totalorder %s23, 5
      %p80 = por %p78, %p79
      %p81 = scmp.ne.s32.totalorder %s73, %s76
      %p82 = scmp.eq.s32.totalorder %s23, 0
      %p83 = por %p81, %p82
      %p84 = scmp.ne.s32.totalorder %s73, %s76
      %p85 = scmp.eq.s32.totalorder %s28, 5
      %p86 = por %p84, %p85
      %p87 = scmp.ne.s32.totalorder %s76, %s77
      %p88 = scmp.eq.s32.totalorder %s28, 0
      %p89 = por %p87, %p88
      %p90 = scmp.ne.s32.totalorder %s76, %s77
      %p91 = scmp.eq.s32.totalorder %s29, 5
      %p92 = por %p90, %p91
      %p94 = scmp.ne.s32.totalorder %s77, %s93
      %p95 = scmp.eq.s32.totalorder %s29, 0
      %p96 = por %p94, %p95
      %s97 = ssub.s32 %s30, %s42
      %s98 = ssub.s32 %s31, %s38
      %s99 = sor.u32 %s97, %s98
      %p100 = scmp.eq.s32.totalorder %s99, 0
      %s102 = sadd.s32 %s101, 1
      %s103 = scalar_select %p100, %s101, %s102
      %p106 = pneg %p100
      %p107 = scmp.eq.s32.totalorder %s23, 5
      %p108 = por %p106, %p107
      %p109 = scmp.ne.s32.totalorder %s101, %s104
      %p110 = scmp.eq.s32.totalorder %s23, 0
      %p111 = por %p109, %p110
      %p112 = scmp.ne.s32.totalorder %s101, %s104
      %p113 = scmp.eq.s32.totalorder %s28, 5
      %p114 = por %p112, %p113
      %p115 = scmp.ne.s32.totalorder %s104, %s105
      %p116 = scmp.eq.s32.totalorder %s28, 0
      %p117 = por %p115, %p116
      %p118 = scmp.ne.s32.totalorder %s104, %s105
      %p119 = scmp.eq.s32.totalorder %s29, 5
      %p120 = por %p118, %p119
      %p122 = scmp.ne.s32.totalorder %s105, %s121
      %p123 = scmp.eq.s32.totalorder %s29, 0
      %p124 = por %p122, %p123
      %s125 = ssub.s32 %s30, %s42
      %s126 = ssub.s32 %s31, %s38
      %s127 = sor.u32 %s125, %s126
      %p128 = scmp.eq.s32.totalorder %s127, 0
      %s130 = sadd.s32 %s129, 1
      %s131 = scalar_select %p128, %s129, %s130
      %p134 = pneg %p128
      %p135 = scmp.eq.s32.totalorder %s23, 5
      %p136 = por %p134, %p135
      %p137 = scmp.ne.s32.totalorder %s129, %s132
      %p138 = scmp.eq.s32.totalorder %s23, 0
      %p139 = por %p137, %p138
      %p140 = scmp.ne.s32.totalorder %s129, %s132
      %p141 = scmp.eq.s32.totalorder %s28, 5
      %p142 = por %p140, %p141
      %p143 = scmp.ne.s32.totalorder %s132, %s133
      %p144 = scmp.eq.s32.totalorder %s28, 0
      %p145 = por %p143, %p144
      %p146 = scmp.ne.s32.totalorder %s132, %s133
      %p147 = scmp.eq.s32.totalorder %s29, 5
      %p148 = por %p146, %p147
      %p150 = scmp.ne.s32.totalorder %s133, %s149
      %p151 = scmp.eq.s32.totalorder %s29, 0
      %p152 = por %p150, %p151
      %s153 = ssub.s32 %s30, %s42
      %s154 = ssub.s32 %s31, %s38
      %s155 = sor.u32 %s153, %s154
      %p156 = scmp.eq.s32.totalorder %s155, 0
      %s158 = sadd.s32 %s157, 1
      %s159 = scalar_select %p156, %s157, %s158
      %p162 = pneg %p156
      %p163 = scmp.eq.s32.totalorder %s23, 5
      %p164 = por %p162, %p163
      %p165 = scmp.ne.s32.totalorder %s157, %s160
      %p166 = scmp.eq.s32.totalorder %s23, 0
      %p167 = por %p165, %p166
      %p168 = scmp.ne.s32.totalorder %s157, %s160
      %p169 = scmp.eq.s32.totalorder %s28, 5
      %p170 = por %p168, %p169
      %p171 = scmp.ne.s32.totalorder %s160, %s161
      %p172 = scmp.eq.s32.totalorder %s28, 0
      %p173 = por %p171, %p172
      %p174 = scmp.ne.s32.totalorder %s160, %s161
      %p175 = scmp.eq.s32.totalorder %s29, 5
      %p176 = por %p174, %p175
      %p178 = scmp.ne.s32.totalorder %s161, %s177
      %p179 = scmp.eq.s32.totalorder %s29, 0
      %p180 = por %p178, %p179
      %p181 = scmp.le.s32.totalorder 1, %s23
      %p182 = scmp.lt.s32.totalorder %s23, 7
      %p183 = pnand %p181, %p182
      %p184 = pneg %p183
      // Predicated region
      $region9: #{tpu_custom_call.1} parent=5 // pred_check
        _
      $region10: #{tpu_custom_call.1} parent=5 // pred_check_branch
        %186 = sbr.rel (%p183) target = $region12
      $region11: #{tpu_custom_call.1} parent=5 // pred_region
        %s187 = ssub.s32 %s23, 1
      $region12: #{tpu_custom_call.1} parent=5 // pred_fallthru
        _
      %p188 = scmp.lt.s32.totalorder %s23, 6
      // Predicated region
      $region13: #{tpu_custom_call.1} parent=5 // pred_check
        %p189 = pneg %p188
      $region14: #{tpu_custom_call.1} parent=5 // pred_check_branch
        %191 = sbr.rel (%p189) target = $region16
      $region15: #{tpu_custom_call.1} parent=5 // pred_region
        // Predicated region
        $region17: #{tpu_custom_call.1} parent=15 // pred_check
          %p192 = pneg %p55
        $region18: #{tpu_custom_call.1} parent=15 // pred_check_branch
          %194 = sbr.rel (%p192) target = $region20
        $region19: #{tpu_custom_call.1} parent=15 // pred_region
          %s195 = sand.u32 %s45, 1
          %s196 = scalar_lea.sflag [#allocation4], %s195
          %s197 = sand.u32 %s45, 1
          %s198 = smul.addr %s197, 16
          %s199 = scalar_lea.vmem [#allocation3], %s198
          %s201 = ssub.s32 256, 256
          %202 = vsyncadd %s196, %s201
          %s203 = smul.addr %s30, 2
          %s204 = smul.addr %s203, 128
          %s205 = scalar_lea.hbm %s0, %s204
          %s206 = sshll.u32 %s199, 4
          %s207 = int_to_ptr.vmem [resolvable:$true] %s206
          %212 = dma.hbm_to_vmem [thread:$0]  %s205, 256, %s207, %s196, 128, 128, 8
        $region20: #{tpu_custom_call.1} parent=15 // pred_fallthru
          _
      $region16: #{tpu_custom_call.1} parent=5 // pred_fallthru
        _
      %p213 = scmp.le.s32.totalorder 1, %s23
      %p214 = scmp.lt.s32.totalorder %s23, 7
      %p215 = pnand %p213, %p214
      %p216 = pneg %p215
      // Predicated region
      $region21: #{tpu_custom_call.1} parent=5 // pred_check
        _
      $region22: #{tpu_custom_call.1} parent=5 // pred_check_branch
        %218 = sbr.rel (%p215) target = $region24
      $region23: #{tpu_custom_call.1} parent=5 // pred_region
        %s219 = ssub.s32 %s23, 1
        %s220 = sand.u32 %s48, 1
        %s221 = scalar_lea.sflag [#allocation4], %s220
        %s222 = sand.u32 %s48, 1
        %s223 = smul.addr %s222, 16
        %s224 = scalar_lea.vmem [#allocation3], %s223
        // Predicated region
        $region25: #{tpu_custom_call.1} parent=23 // pred_check
          %p225 = pneg %p61
        $region26: #{tpu_custom_call.1} parent=23 // pred_check_branch
          %227 = sbr.rel (%p225) target = $region28
        $region27: #{tpu_custom_call.1} parent=23 // pred_region
          %228 = dma.done %s221, 256
        $region28: #{tpu_custom_call.1} parent=23 // pred_fallthru
          _
        %s229 = sand.u32 %s48, 1
        %s230 = scalar_lea.sflag [#allocation4], %s229
        %s231 = sand.u32 %s48, 1
        %s232 = smul.addr %s231, 16
        %s233 = scalar_lea.vmem [#allocation3], %s232
        %p234 = pneg %p61
        %p235 = pneg %p58
        %p236 = pneg %p89
        %p237 = pneg %p86
        %s238 = sand.u32 %s76, 1
        %s239 = scalar_lea.sflag [#allocation5], %s238
        %s240 = sand.u32 %s76, 1
        %s241 = smul.addr %s240, 16
        %s242 = scalar_lea.vmem [#allocation6], %s241
        %p243 = pneg %p117
        %p244 = pneg %p114
        %s245 = sand.u32 %s28, 1
        %s246 = scalar_lea.sflag [#allocation8], %s245
        %s247 = sand.u32 %s104, 1
        %s248 = smul.addr %s247, 16
        %s249 = scalar_lea.vmem [#allocation7], %s248
        %p250 = pneg %p145
        %p251 = pneg %p142
        %s252 = sand.u32 %s28, 1
        %s253 = scalar_lea.sflag [#allocation8], %s252
        %s254 = sand.u32 %s132, 1
        %s255 = smul.addr %s254, 16
        %s256 = scalar_lea.vmem [#allocation9], %s255
        %p257 = pneg %p173
        %p258 = pneg %p170
        %s259 = sand.u32 %s160, 1
        %s260 = scalar_lea.sflag [#allocation11], %s259
        %s261 = sand.u32 %s160, 1
        %s262 = smul.addr %s261, 16
        %s263 = scalar_lea.vmem [#allocation10], %s262
        %v264 = vld [vmem:[%s224] sm:$0xff]
        %v265 = vld [vmem:[%s224 + $0x8] sm:$0xff]
        %v266 = vlaneseq
        %v267 = vand.u32 %v266, 127
        %v268 = vlaneseq
        %v269 = vshrl.u32 %v268, 7
        %v270 = vadd.s32 %v269, 8
        %vm271 = vcmp.gt.s32.totalorder %v267, 0
        %v272 = vsel %vm271, 1.0, 0.0
        %vm273 = vcmp.lt.s32.totalorder %v267, 15
        %v274 = vsel %vm273, 1.0, 0.0
        %vm275 = vcmp.gt.s32.totalorder %v269, 0
        %vm276 = vcmp.gt.s32.totalorder %v270, 0
        %v277 = vsel %vm275, 1.0, 0.0
        %v278 = vsel %vm276, 1.0, 0.0
        %vm279 = vcmp.lt.s32.totalorder %v269, 15
        %vm280 = vcmp.lt.s32.totalorder %v270, 15
        %v281 = vsel %vm279, 1.0, 0.0
        %v282 = vsel %vm280, 1.0, 0.0
        %p283 = scmp.eq.s32.totalorder %s33, 0
        // Predicated region
        $region29: #{tpu_custom_call.1} parent=23 // pred_check
          %p284 = pneg %p283
        $region30: #{tpu_custom_call.1} parent=23 // pred_check_branch
          %286 = sbr.rel (%p284) target = $region32
        $region31: #{tpu_custom_call.1} parent=23 // pred_region
          %287 = vst [vmem:[#allocation2] sm:$0xff] %v264
          %288 = vst [vmem:[#allocation2 + $0x8] sm:$0xff] %v265
        $region32: #{tpu_custom_call.1} parent=23 // pred_fallthru
          _
        %v289 = vld [vmem:[#allocation2] sm:$0xff]
        %v290 = vld [vmem:[#allocation2 + $0x8] sm:$0xff]
        %291 = vst [vmem:[%s256] sm:$0xff] %v289
        %292 = vst [vmem:[%s256 + $0x8] sm:$0xff] %v290
        %293 = vrot.lane.b32.xlu0 %v289, 1
        %v294 = vpop.permute.xlu0 %293
        %295 = vrot.lane.b32.xlu0 %v290, 1
        %v296 = vpop.permute.xlu0 %295
        %v297 = vmul.f32 %v294, %v272
        %v298 = vmul.f32 %v296, %v272
        %299 = vrot.lane.b32.xlu0 %v289, 127
        %v300 = vpop.permute.xlu0 %299
        %301 = vrot.lane.b32.xlu0 %v290, 127
        %v302 = vpop.permute.xlu0 %301
        %v303 = vmul.f32 %v300, %v274
        %v304 = vmul.f32 %v302, %v274
        %v305 = vmul.f32 %v297, 0.035281047
        %v306 = vmul.f32 %v298, 0.035281047
        %v307 = vmul.f32 %v289, 0.0080031445
        %v308 = vmul.f32 %v290, 0.0080031445
        %v309 = vadd.f32 %v305, %v307
        %v310 = vadd.f32 %v306, %v308
        %v311 = vmul.f32 %v303, 0.01957476
        %v312 = vmul.f32 %v304, 0.01957476
        %v313 = vadd.f32 %v309, %v311
        %v314 = vadd.f32 %v310, %v312
        %v315 = vmul.f32 %v297, 0.044817865
        %v316 = vmul.f32 %v298, 0.044817865
        %v317 = vmul.f32 %v289, 0.03735116
        %v318 = vmul.f32 %v290, 0.03735116
        %v319 = vadd.f32 %v315, %v317
        %v320 = vadd.f32 %v316, %v318
        %v321 = vmul.f32 %v303, -0.019545557
        %v322 = vmul.f32 %v304, -0.019545557
        %v323 = vadd.f32 %v319, %v321
        %v324 = vadd.f32 %v320, %v322
        %v325 = vmul.f32 %v297, 0.019001769
        %v326 = vmul.f32 %v298, 0.019001769
        %v327 = vmul.f32 %v289, -0.0030271441
        %v328 = vmul.f32 %v290, -0.0030271441
        %v329 = vadd.f32 %v325, %v327
        %v330 = vadd.f32 %v326, %v328
        %v331 = vmul.f32 %v303, -0.002064377
        %v332 = vmul.f32 %v304, -0.002064377
        %v333 = vadd.f32 %v329, %v331
        %v334 = vadd.f32 %v330, %v332
        %v335 = vrot.slane %v313, 7
        %v336 = vrot.slane %v314, 7
        %vm337 = vcmp.lt.s32.totalorder %v269, 1
        %v338 = vsel %vm337, %v335, %v336
        %v339 = vsel %vm337, %v336, %v335
        %v340 = vmul.f32 %v339, %v277
        %v341 = vmul.f32 %v338, %v278
        %v342 = vadd.f32 %v323, %v340
        %v343 = vadd.f32 %v324, %v341
        %v344 = vrot.slane %v333, 1
        %v345 = vrot.slane %v334, 1
        %vm346 = vcmp.lt.s32.totalorder %v269, 7
        %v347 = vsel %vm346, %v344, %v345
        %v348 = vsel %vm346, %v345, %v344
        %v349 = vmul.f32 %v347, %v281
        %v350 = vmul.f32 %v348, %v282
        %v351 = vadd.f32 %v342, %v349
        %v352 = vadd.f32 %v343, %v350
        %v353 = vmax.f32 %v351, 0.0
        %v354 = vmax.f32 %v352, 0.0
        %355 = vrot.lane.b32.xlu0 %v353, 1
        %v356 = vpop.permute.xlu0 %355
        %357 = vrot.lane.b32.xlu0 %v354, 1
        %v358 = vpop.permute.xlu0 %357
        %v359 = vmul.f32 %v356, %v272
        %v360 = vmul.f32 %v358, %v272
        %361 = vrot.lane.b32.xlu0 %v353, 127
        %v362 = vpop.permute.xlu0 %361
        %363 = vrot.lane.b32.xlu0 %v354, 127
        %v364 = vpop.permute.xlu0 %363
        %v365 = vmul.f32 %v362, %v274
        %v366 = vmul.f32 %v364, %v274
        %v367 = vmul.f32 %v359, 0.008263348
        %v368 = vmul.f32 %v360, 0.008263348
        %v369 = vmul.f32 %v353, 0.0028988952
        %v370 = vmul.f32 %v354, 0.0028988952
        %v371 = vadd.f32 %v367, %v369
        %v372 = vadd.f32 %v368, %v370
        %v373 = vmul.f32 %v365, 0.02926744
        %v374 = vmul.f32 %v366, 0.02926744
        %v375 = vadd.f32 %v371, %v373
        %v376 = vadd.f32 %v372, %v374
        %v377 = vmul.f32 %v359, 0.015315981
        %v378 = vmul.f32 %v360, 0.015315981
        %v379 = vmul.f32 %v353, 0.002448725
        %v380 = vmul.f32 %v354, 0.002448725
        %v381 = vadd.f32 %v377, %v379
        %v382 = vadd.f32 %v378, %v380
        %v383 = vmul.f32 %v365, 0.008932804
        %v384 = vmul.f32 %v366, 0.008932804
        %v385 = vadd.f32 %v381, %v383
        %v386 = vadd.f32 %v382, %v384
        %v387 = vmul.f32 %v359, 0.006715238
        %v388 = vmul.f32 %v360, 0.006715238
        %v389 = vmul.f32 %v353, 0.030068532
        %v390 = vmul.f32 %v354, 0.030068532
        %v391 = vadd.f32 %v387, %v389
        %v392 = vadd.f32 %v388, %v390
        %v393 = vmul.f32 %v365, -0.004128836
        %v394 = vmul.f32 %v366, -0.004128836
        %v395 = vadd.f32 %v391, %v393
        %v396 = vadd.f32 %v392, %v394
        %v397 = vrot.slane %v375, 7
        %v398 = vrot.slane %v376, 7
        %v399 = vsel %vm337, %v397, %v398
        %v400 = vsel %vm337, %v398, %v397
        %v401 = vmul.f32 %v400, %v277
        %v402 = vmul.f32 %v399, %v278
        %v403 = vadd.f32 %v385, %v401
        %v404 = vadd.f32 %v386, %v402
        %v405 = vrot.slane %v395, 1
        %v406 = vrot.slane %v396, 1
        %v407 = vsel %vm346, %v405, %v406
        %v408 = vsel %vm346, %v406, %v405
        %v409 = vmul.f32 %v407, %v281
        %v410 = vmul.f32 %v408, %v282
        %v411 = vadd.f32 %v403, %v409
        %v412 = vadd.f32 %v404, %v410
        %v413 = vmax.f32 %v411, 0.0
        %v414 = vmax.f32 %v412, 0.0
        %v415 = vadd.f32 %v353, %v413
        %v416 = vadd.f32 %v354, %v414
        %417 = vrot.lane.b32.xlu0 %v415, 1
        %v418 = vpop.permute.xlu0 %417
        %419 = vrot.lane.b32.xlu0 %v416, 1
        %v420 = vpop.permute.xlu0 %419
        %v421 = vmul.f32 %v418, %v272
        %v422 = vmul.f32 %v420, %v272
        %423 = vrot.lane.b32.xlu0 %v415, 127
        %v424 = vpop.permute.xlu0 %423
        %425 = vrot.lane.b32.xlu0 %v416, 127
        %v426 = vpop.permute.xlu0 %425
        %v427 = vmul.f32 %v424, %v274
        %v428 = vmul.f32 %v426, %v274
        %v429 = vmul.f32 %v421, 0.008263348
        %v430 = vmul.f32 %v422, 0.008263348
        %v431 = vmul.f32 %v415, 0.0028988952
        %v432 = vmul.f32 %v416, 0.0028988952
        %v433 = vadd.f32 %v429, %v431
        %v434 = vadd.f32 %v430, %v432
        %v435 = vmul.f32 %v427, 0.02926744
        %v436 = vmul.f32 %v428, 0.02926744
        %v437 = vadd.f32 %v433, %v435
        %v438 = vadd.f32 %v434, %v436
        %v439 = vmul.f32 %v421, 0.015315981
        %v440 = vmul.f32 %v422, 0.015315981
        %v441 = vmul.f32 %v415, 0.002448725
        %v442 = vmul.f32 %v416, 0.002448725
        %v443 = vadd.f32 %v439, %v441
        %v444 = vadd.f32 %v440, %v442
        %v445 = vmul.f32 %v427, 0.008932804
        %v446 = vmul.f32 %v428, 0.008932804
        %v447 = vadd.f32 %v443, %v445
        %v448 = vadd.f32 %v444, %v446
        %v449 = vmul.f32 %v421, 0.006715238
        %v450 = vmul.f32 %v422, 0.006715238
        %v451 = vmul.f32 %v415, 0.030068532
        %v452 = vmul.f32 %v416, 0.030068532
        %v453 = vadd.f32 %v449, %v451
        %v454 = vadd.f32 %v450, %v452
        %v455 = vmul.f32 %v427, -0.004128836
        %v456 = vmul.f32 %v428, -0.004128836
        %v457 = vadd.f32 %v453, %v455
        %v458 = vadd.f32 %v454, %v456
        %v459 = vrot.slane %v437, 7
        %v460 = vrot.slane %v438, 7
        %v461 = vsel %vm337, %v459, %v460
        %v462 = vsel %vm337, %v460, %v459
        %v463 = vmul.f32 %v462, %v277
        %v464 = vmul.f32 %v461, %v278
        %v465 = vadd.f32 %v447, %v463
        %v466 = vadd.f32 %v448, %v464
        %v467 = vrot.slane %v457, 1
        %v468 = vrot.slane %v458, 1
        %v469 = vsel %vm346, %v467, %v468
        %v470 = vsel %vm346, %v468, %v467
        %v471 = vmul.f32 %v469, %v281
        %v472 = vmul.f32 %v470, %v282
        %v473 = vadd.f32 %v465, %v471
        %v474 = vadd.f32 %v466, %v472
        %v475 = vmax.f32 %v473, 0.0
        %v476 = vmax.f32 %v474, 0.0
        %v477 = vadd.f32 %v415, %v475
        %v478 = vadd.f32 %v416, %v476
        %479 = vrot.lane.b32.xlu0 %v477, 1
        %v480 = vpop.permute.xlu0 %479
        %481 = vrot.lane.b32.xlu0 %v478, 1
        %v482 = vpop.permute.xlu0 %481
        %v483 = vmul.f32 %v480, %v272
        %v484 = vmul.f32 %v482, %v272
        %485 = vrot.lane.b32.xlu0 %v477, 127
        %v486 = vpop.permute.xlu0 %485
        %487 = vrot.lane.b32.xlu0 %v478, 127
        %v488 = vpop.permute.xlu0 %487
        %v489 = vmul.f32 %v486, %v274
        %v490 = vmul.f32 %v488, %v274
        %v491 = vmul.f32 %v483, 0.008263348
        %v492 = vmul.f32 %v484, 0.008263348
        %v493 = vmul.f32 %v477, 0.0028988952
        %v494 = vmul.f32 %v478, 0.0028988952
        %v495 = vadd.f32 %v491, %v493
        %v496 = vadd.f32 %v492, %v494
        %v497 = vmul.f32 %v489, 0.02926744
        %v498 = vmul.f32 %v490, 0.02926744
        %v499 = vadd.f32 %v495, %v497
        %v500 = vadd.f32 %v496, %v498
        %v501 = vmul.f32 %v483, 0.015315981
        %v502 = vmul.f32 %v484, 0.015315981
        %v503 = vmul.f32 %v477, 0.002448725
        %v504 = vmul.f32 %v478, 0.002448725
        %v505 = vadd.f32 %v501, %v503
        %v506 = vadd.f32 %v502, %v504
        %v507 = vmul.f32 %v489, 0.008932804
        %v508 = vmul.f32 %v490, 0.008932804
        %v509 = vadd.f32 %v505, %v507
        %v510 = vadd.f32 %v506, %v508
        %v511 = vmul.f32 %v483, 0.006715238
        %v512 = vmul.f32 %v484, 0.006715238
        %v513 = vmul.f32 %v477, 0.030068532
        %v514 = vmul.f32 %v478, 0.030068532
        %v515 = vadd.f32 %v511, %v513
        %v516 = vadd.f32 %v512, %v514
        %v517 = vmul.f32 %v489, -0.004128836
        %v518 = vmul.f32 %v490, -0.004128836
        %v519 = vadd.f32 %v515, %v517
        %v520 = vadd.f32 %v516, %v518
        %v521 = vrot.slane %v499, 7
        %v522 = vrot.slane %v500, 7
        %v523 = vsel %vm337, %v521, %v522
        %v524 = vsel %vm337, %v522, %v521
        %v525 = vmul.f32 %v524, %v277
        %v526 = vmul.f32 %v523, %v278
        %v527 = vadd.f32 %v509, %v525
        %v528 = vadd.f32 %v510, %v526
        %v529 = vrot.slane %v519, 1
        %v530 = vrot.slane %v520, 1
        %v531 = vsel %vm346, %v529, %v530
        %v532 = vsel %vm346, %v530, %v529
        %v533 = vmul.f32 %v531, %v281
        %v534 = vmul.f32 %v532, %v282
        %v535 = vadd.f32 %v527, %v533
        %v536 = vadd.f32 %v528, %v534
        %v537 = vmax.f32 %v535, 0.0
        %v538 = vmax.f32 %v536, 0.0
        %v539 = vadd.f32 %v477, %v537
        %v540 = vadd.f32 %v478, %v538
        %541 = vrot.lane.b32.xlu0 %v539, 1
        %v542 = vpop.permute.xlu0 %541
        %543 = vrot.lane.b32.xlu0 %v540, 1
        %v544 = vpop.permute.xlu0 %543
        %v545 = vmul.f32 %v542, %v272
        %v546 = vmul.f32 %v544, %v272
        %547 = vrot.lane.b32.xlu0 %v539, 127
        %v548 = vpop.permute.xlu0 %547
        %549 = vrot.lane.b32.xlu0 %v540, 127
        %v550 = vpop.permute.xlu0 %549
        %v551 = vmul.f32 %v548, %v274
        %v552 = vmul.f32 %v550, %v274
        %v553 = vmul.f32 %v545, -0.017081914
        %v554 = vmul.f32 %v546, -0.017081914
        %v555 = vmul.f32 %v539, -0.051059797
        %v556 = vmul.f32 %v540, -0.051059797
        %v557 = vadd.f32 %v553, %v555
        %v558 = vadd.f32 %v554, %v556
        %v559 = vmul.f32 %v551, 0.0130723715
        %v560 = vmul.f32 %v552, 0.0130723715
        %v561 = vadd.f32 %v557, %v559
        %v562 = vadd.f32 %v558, %v560
        %v563 = vmul.f32 %v545, 0.017288724
        %v564 = vmul.f32 %v546, 0.017288724
        %v565 = vmul.f32 %v539, -0.0148433
        %v566 = vmul.f32 %v540, -0.0148433
        %v567 = vadd.f32 %v563, %v565
        %v568 = vadd.f32 %v564, %v566
        %v569 = vmul.f32 %v551, 0.04539509
        %v570 = vmul.f32 %v552, 0.04539509
        %v571 = vadd.f32 %v567, %v569
        %v572 = vadd.f32 %v568, %v570
        %v573 = vmul.f32 %v545, -0.029087314
        %v574 = vmul.f32 %v546, -0.029087314
        %v575 = vmul.f32 %v539, 0.00091517036
        %v576 = vmul.f32 %v540, 0.00091517036
        %v577 = vadd.f32 %v573, %v575
        %v578 = vadd.f32 %v574, %v576
        %v579 = vmul.f32 %v551, -0.003743677
        %v580 = vmul.f32 %v552, -0.003743677
        %v581 = vadd.f32 %v577, %v579
        %v582 = vadd.f32 %v578, %v580
        %v583 = vrot.slane %v561, 7
        %v584 = vrot.slane %v562, 7
        %v585 = vsel %vm337, %v583, %v584
        %v586 = vsel %vm337, %v584, %v583
        %v587 = vmul.f32 %v586, %v277
        %v588 = vmul.f32 %v585, %v278
        %v589 = vadd.f32 %v571, %v587
        %v590 = vadd.f32 %v572, %v588
        %v591 = vrot.slane %v581, 1
        %v592 = vrot.slane %v582, 1
        %v593 = vsel %vm346, %v591, %v592
        %v594 = vsel %vm346, %v592, %v591
        %v595 = vmul.f32 %v593, %v281
        %v596 = vmul.f32 %v594, %v282
        %v597 = vadd.f32 %v589, %v595
        %v598 = vadd.f32 %v590, %v596
        %v599 = vsub.f32 0.0, %v597
        %v600 = vsub.f32 0.0, %v598
        %v601 = vmul.f32 %v599, 1.442695
        %v602 = vpow.pop %v601
        %v603 = vmul.f32 %v600, 1.442695
        %v604 = vpow.pop %v603
        %v605 = vadd.f32 %v602, 1.0
        %v606 = vadd.f32 %v604, 1.0
        %v607 = vrcp.pop %v605
        %v608 = vrcp.pop %v606
        %v609 = vadd.f32 %v607, %v289
        %v610 = vadd.f32 %v608, %v290
        %v611 = vmax.f32 %v609, 0.0001
        %v612 = vmax.f32 %v610, 0.0001
        %v613 = vmin.f32 %v611, 1.0
        %v614 = vmin.f32 %v612, 1.0
        %v615 = vrcp.pop %v613
        %v616 = vrcp.pop %v614
        %v617 = vmul.f32 %v264, %v615
        %v618 = vmul.f32 %v265, %v616
        %v619 = vmax.f32 %v617, 0.0
        %v620 = vmax.f32 %v618, 0.0
        %v621 = vmin.f32 %v619, 1.0
        %v622 = vmin.f32 %v620, 1.0
        %623 = vrot.lane.b32.xlu0 %v621, 1
        %v624 = vpop.permute.xlu0 %623
        %625 = vrot.lane.b32.xlu0 %v622, 1
        %v626 = vpop.permute.xlu0 %625
        %v627 = vmul.f32 %v624, %v272
        %v628 = vmul.f32 %v626, %v272
        %629 = vrot.lane.b32.xlu0 %v621, 127
        %v630 = vpop.permute.xlu0 %629
        %631 = vrot.lane.b32.xlu0 %v622, 127
        %v632 = vpop.permute.xlu0 %631
        %v633 = vmul.f32 %v630, %v274
        %v634 = vmul.f32 %v632, %v274
        %v635 = vmul.f32 %v627, 0.03139262
        %v636 = vmul.f32 %v628, 0.03139262
        %v637 = vmul.f32 %v621, 0.030093716
        %v638 = vmul.f32 %v622, 0.030093716
        %v639 = vadd.f32 %v635, %v637
        %v640 = vadd.f32 %v636, %v638
        %v641 = vmul.f32 %v633, 0.0031734551
        %v642 = vmul.f32 %v634, 0.0031734551
        %v643 = vadd.f32 %v639, %v641
        %v644 = vadd.f32 %v640, %v642
        %v645 = vmul.f32 %v627, 0.00774509
        %v646 = vmul.f32 %v628, 0.00774509
        %v647 = vmul.f32 %v621, -0.018182607
        %v648 = vmul.f32 %v622, -0.018182607
        %v649 = vadd.f32 %v645, %v647
        %v650 = vadd.f32 %v646, %v648
        %v651 = vmul.f32 %v633, -0.040568396
        %v652 = vmul.f32 %v634, -0.040568396
        %v653 = vadd.f32 %v649, %v651
        %v654 = vadd.f32 %v650, %v652
        %v655 = vmul.f32 %v627, -0.0071255364
        %v656 = vmul.f32 %v628, -0.0071255364
        %v657 = vmul.f32 %v621, 0.0032021597
        %v658 = vmul.f32 %v622, 0.0032021597
        %v659 = vadd.f32 %v655, %v657
        %v660 = vadd.f32 %v656, %v658
        %v661 = vmul.f32 %v633, 0.0251974
        %v662 = vmul.f32 %v634, 0.0251974
        %v663 = vadd.f32 %v659, %v661
        %v664 = vadd.f32 %v660, %v662
        %v665 = vrot.slane %v643, 7
        %v666 = vrot.slane %v644, 7
        %v667 = vsel %vm337, %v665, %v666
        %v668 = vsel %vm337, %v666, %v665
        %v669 = vmul.f32 %v668, %v277
        %v670 = vmul.f32 %v667, %v278
        %v671 = vadd.f32 %v653, %v669
        %v672 = vadd.f32 %v654, %v670
        %v673 = vrot.slane %v663, 1
        %v674 = vrot.slane %v664, 1
        %v675 = vsel %vm346, %v673, %v674
        %v676 = vsel %vm346, %v674, %v673
        %v677 = vmul.f32 %v675, %v281
        %v678 = vmul.f32 %v676, %v282
        %v679 = vadd.f32 %v671, %v677
        %v680 = vadd.f32 %v672, %v678
        %v681 = vmax.f32 %v679, 0.0
        %v682 = vmax.f32 %v680, 0.0
        %683 = vrot.lane.b32.xlu0 %v681, 1
        %v684 = vpop.permute.xlu0 %683
        %685 = vrot.lane.b32.xlu0 %v682, 1
        %v686 = vpop.permute.xlu0 %685
        %v687 = vmul.f32 %v684, %v272
        %v688 = vmul.f32 %v686, %v272
        %689 = vrot.lane.b32.xlu0 %v681, 127
        %v690 = vpop.permute.xlu0 %689
        %691 = vrot.lane.b32.xlu0 %v682, 127
        %v692 = vpop.permute.xlu0 %691
        %v693 = vmul.f32 %v690, %v274
        %v694 = vmul.f32 %v692, %v274
        %v695 = vmul.f32 %v687, -0.007866954
        %v696 = vmul.f32 %v688, -0.007866954
        %v697 = vmul.f32 %v681, -0.0061400393
        %v698 = vmul.f32 %v682, -0.0061400393
        %v699 = vadd.f32 %v695, %v697
        %v700 = vadd.f32 %v696, %v698
        %v701 = vmul.f32 %v693, -0.02129705
        %v702 = vmul.f32 %v694, -0.02129705
        %v703 = vadd.f32 %v699, %v701
        %v704 = vadd.f32 %v700, %v702
        %v705 = vmul.f32 %v687, -0.028841835
        %v706 = vmul.f32 %v688, -0.028841835
        %v707 = vmul.f32 %v681, -0.034655873
        %v708 = vmul.f32 %v682, -0.034655873
        %v709 = vadd.f32 %v705, %v707
        %v710 = vadd.f32 %v706, %v708
        %v711 = vmul.f32 %v693, 0.039621998
        %v712 = vmul.f32 %v694, 0.039621998
        %v713 = vadd.f32 %v709, %v711
        %v714 = vadd.f32 %v710, %v712
        %v715 = vmul.f32 %v687, -0.010351492
        %v716 = vmul.f32 %v688, -0.010351492
        %v717 = vmul.f32 %v681, -0.008897682
        %v718 = vmul.f32 %v682, -0.008897682
        %v719 = vadd.f32 %v715, %v717
        %v720 = vadd.f32 %v716, %v718
        %v721 = vmul.f32 %v693, -0.025445396
        %v722 = vmul.f32 %v694, -0.025445396
        %v723 = vadd.f32 %v719, %v721
        %v724 = vadd.f32 %v720, %v722
        %v725 = vrot.slane %v703, 7
        %v726 = vrot.slane %v704, 7
        %v727 = vsel %vm337, %v725, %v726
        %v728 = vsel %vm337, %v726, %v725
        %v729 = vmul.f32 %v728, %v277
        %v730 = vmul.f32 %v727, %v278
        %v731 = vadd.f32 %v713, %v729
        %v732 = vadd.f32 %v714, %v730
        %v733 = vrot.slane %v723, 1
        %v734 = vrot.slane %v724, 1
        %v735 = vsel %vm346, %v733, %v734
        %v736 = vsel %vm346, %v734, %v733
        %v737 = vmul.f32 %v735, %v281
        %v738 = vmul.f32 %v736, %v282
        %v739 = vadd.f32 %v731, %v737
        %v740 = vadd.f32 %v732, %v738
        %v741 = vmax.f32 %v739, 0.0
        %v742 = vmax.f32 %v740, 0.0
        %743 = vrot.lane.b32.xlu0 %v741, 1
        %v744 = vpop.permute.xlu0 %743
        %745 = vrot.lane.b32.xlu0 %v742, 1
        %v746 = vpop.permute.xlu0 %745
        %v747 = vmul.f32 %v744, %v272
        %v748 = vmul.f32 %v746, %v272
        %749 = vrot.lane.b32.xlu0 %v741, 127
        %v750 = vpop.permute.xlu0 %749
        %751 = vrot.lane.b32.xlu0 %v742, 127
        %v752 = vpop.permute.xlu0 %751
        %v753 = vmul.f32 %v750, %v274
        %v754 = vmul.f32 %v752, %v274
        %v755 = vmul.f32 %v747, -0.032473058
        %v756 = vmul.f32 %v748, -0.032473058
        %v757 = vmul.f32 %v741, -0.004280523
        %v758 = vmul.f32 %v742, -0.004280523
        %v759 = vadd.f32 %v755, %v757
        %v760 = vadd.f32 %v756, %v758
        %v761 = vmul.f32 %v753, -0.018017583
        %v762 = vmul.f32 %v754, -0.018017583
        %v763 = vadd.f32 %v759, %v761
        %v764 = vadd.f32 %v760, %v762
        %v765 = vmul.f32 %v747, 0.007784822
        %v766 = vmul.f32 %v748, 0.007784822
        %v767 = vmul.f32 %v741, -0.010277853
        %v768 = vmul.f32 %v742, -0.010277853
        %v769 = vadd.f32 %v765, %v767
        %v770 = vadd.f32 %v766, %v768
        %v771 = vmul.f32 %v753, -0.023755368
        %v772 = vmul.f32 %v754, -0.023755368
        %v773 = vadd.f32 %v769, %v771
        %v774 = vadd.f32 %v770, %v772
        %v775 = vmul.f32 %v747, -0.00056705147
        %v776 = vmul.f32 %v748, -0.00056705147
        %v777 = vmul.f32 %v741, 0.008618417
        %v778 = vmul.f32 %v742, 0.008618417
        %v779 = vadd.f32 %v775, %v777
        %v780 = vadd.f32 %v776, %v778
        %v781 = vmul.f32 %v753, 0.0013383856
        %v782 = vmul.f32 %v754, 0.0013383856
        %v783 = vadd.f32 %v779, %v781
        %v784 = vadd.f32 %v780, %v782
        %v785 = vrot.slane %v763, 7
        %v786 = vrot.slane %v764, 7
        %v787 = vsel %vm337, %v785, %v786
        %v788 = vsel %vm337, %v786, %v785
        %v789 = vmul.f32 %v788, %v277
        %v790 = vmul.f32 %v787, %v278
        %v791 = vadd.f32 %v773, %v789
        %v792 = vadd.f32 %v774, %v790
        %v793 = vrot.slane %v783, 1
        %v794 = vrot.slane %v784, 1
        %v795 = vsel %vm346, %v793, %v794
        %v796 = vsel %vm346, %v794, %v793
        %v797 = vmul.f32 %v795, %v281
        %v798 = vmul.f32 %v796, %v282
        %v799 = vadd.f32 %v791, %v797
        %v800 = vadd.f32 %v792, %v798
        %v801 = vmax.f32 %v799, 0.0
        %v802 = vmax.f32 %v800, 0.0
        %v803 = vadd.f32 %v681, %v801
        %v804 = vadd.f32 %v682, %v802
        %805 = vrot.lane.b32.xlu0 %v803, 1
        %v806 = vpop.permute.xlu0 %805
        %807 = vrot.lane.b32.xlu0 %v804, 1
        %v808 = vpop.permute.xlu0 %807
        %v809 = vmul.f32 %v806, %v272
        %v810 = vmul.f32 %v808, %v272
        %811 = vrot.lane.b32.xlu0 %v803, 127
        %v812 = vpop.permute.xlu0 %811
        %813 = vrot.lane.b32.xlu0 %v804, 127
        %v814 = vpop.permute.xlu0 %813
        %v815 = vmul.f32 %v812, %v274
        %v816 = vmul.f32 %v814, %v274
        %v817 = vmul.f32 %v809, -0.007866954
        %v818 = vmul.f32 %v810, -0.007866954
        %v819 = vmul.f32 %v803, -0.0061400393
        %v820 = vmul.f32 %v804, -0.0061400393
        %v821 = vadd.f32 %v817, %v819
        %v822 = vadd.f32 %v818, %v820
        %v823 = vmul.f32 %v815, -0.02129705
        %v824 = vmul.f32 %v816, -0.02129705
        %v825 = vadd.f32 %v821, %v823
        %v826 = vadd.f32 %v822, %v824
        %v827 = vmul.f32 %v809, -0.028841835
        %v828 = vmul.f32 %v810, -0.028841835
        %v829 = vmul.f32 %v803, -0.034655873
        %v830 = vmul.f32 %v804, -0.034655873
        %v831 = vadd.f32 %v827, %v829
        %v832 = vadd.f32 %v828, %v830
        %v833 = vmul.f32 %v815, 0.039621998
        %v834 = vmul.f32 %v816, 0.039621998
        %v835 = vadd.f32 %v831, %v833
        %v836 = vadd.f32 %v832, %v834
        %v837 = vmul.f32 %v809, -0.010351492
        %v838 = vmul.f32 %v810, -0.010351492
        %v839 = vmul.f32 %v803, -0.008897682
        %v840 = vmul.f32 %v804, -0.008897682
        %v841 = vadd.f32 %v837, %v839
        %v842 = vadd.f32 %v838, %v840
        %v843 = vmul.f32 %v815, -0.025445396
        %v844 = vmul.f32 %v816, -0.025445396
        %v845 = vadd.f32 %v841, %v843
        %v846 = vadd.f32 %v842, %v844
        %v847 = vrot.slane %v825, 7
        %v848 = vrot.slane %v826, 7
        %v849 = vsel %vm337, %v847, %v848
        %v850 = vsel %vm337, %v848, %v847
        %v851 = vmul.f32 %v850, %v277
        %v852 = vmul.f32 %v849, %v278
        %v853 = vadd.f32 %v835, %v851
        %v854 = vadd.f32 %v836, %v852
        %v855 = vrot.slane %v845, 1
        %v856 = vrot.slane %v846, 1
        %v857 = vsel %vm346, %v855, %v856
        %v858 = vsel %vm346, %v856, %v855
        %v859 = vmul.f32 %v857, %v281
        %v860 = vmul.f32 %v858, %v282
        %v861 = vadd.f32 %v853, %v859
        %v862 = vadd.f32 %v854, %v860
        %v863 = vmax.f32 %v861, 0.0
        %v864 = vmax.f32 %v862, 0.0
        %865 = vrot.lane.b32.xlu0 %v863, 1
        %v866 = vpop.permute.xlu0 %865
        %867 = vrot.lane.b32.xlu0 %v864, 1
        %v868 = vpop.permute.xlu0 %867
        %v869 = vmul.f32 %v866, %v272
        %v870 = vmul.f32 %v868, %v272
        %871 = vrot.lane.b32.xlu0 %v863, 127
        %v872 = vpop.permute.xlu0 %871
        %873 = vrot.lane.b32.xlu0 %v864, 127
        %v874 = vpop.permute.xlu0 %873
        %v875 = vmul.f32 %v872, %v274
        %v876 = vmul.f32 %v874, %v274
        %v877 = vmul.f32 %v869, -0.032473058
        %v878 = vmul.f32 %v870, -0.032473058
        %v879 = vmul.f32 %v863, -0.004280523
        %v880 = vmul.f32 %v864, -0.004280523
        %v881 = vadd.f32 %v877, %v879
        %v882 = vadd.f32 %v878, %v880
        %v883 = vmul.f32 %v875, -0.018017583
        %v884 = vmul.f32 %v876, -0.018017583
        %v885 = vadd.f32 %v881, %v883
        %v886 = vadd.f32 %v882, %v884
        %v887 = vmul.f32 %v869, 0.007784822
        %v888 = vmul.f32 %v870, 0.007784822
        %v889 = vmul.f32 %v863, -0.010277853
        %v890 = vmul.f32 %v864, -0.010277853
        %v891 = vadd.f32 %v887, %v889
        %v892 = vadd.f32 %v888, %v890
        %v893 = vmul.f32 %v875, -0.023755368
        %v894 = vmul.f32 %v876, -0.023755368
        %v895 = vadd.f32 %v891, %v893
        %v896 = vadd.f32 %v892, %v894
        %v897 = vmul.f32 %v869, -0.00056705147
        %v898 = vmul.f32 %v870, -0.00056705147
        %v899 = vmul.f32 %v863, 0.008618417
        %v900 = vmul.f32 %v864, 0.008618417
        %v901 = vadd.f32 %v897, %v899
        %v902 = vadd.f32 %v898, %v900
        %v903 = vmul.f32 %v875, 0.0013383856
        %v904 = vmul.f32 %v876, 0.0013383856
        %v905 = vadd.f32 %v901, %v903
        %v906 = vadd.f32 %v902, %v904
        %v907 = vrot.slane %v885, 7
        %v908 = vrot.slane %v886, 7
        %v909 = vsel %vm337, %v907, %v908
        %v910 = vsel %vm337, %v908, %v907
        %v911 = vmul.f32 %v910, %v277
        %v912 = vmul.f32 %v909, %v278
        %v913 = vadd.f32 %v895, %v911
        %v914 = vadd.f32 %v896, %v912
        %v915 = vrot.slane %v905, 1
        %v916 = vrot.slane %v906, 1
        %v917 = vsel %vm346, %v915, %v916
        %v918 = vsel %vm346, %v916, %v915
        %v919 = vmul.f32 %v917, %v281
        %v920 = vmul.f32 %v918, %v282
        %v921 = vadd.f32 %v913, %v919
        %v922 = vadd.f32 %v914, %v920
        %v923 = vmax.f32 %v921, 0.0
        %v924 = vmax.f32 %v922, 0.0
        %v925 = vadd.f32 %v803, %v923
        %v926 = vadd.f32 %v804, %v924
        %927 = vrot.lane.b32.xlu0 %v925, 1
        %v928 = vpop.permute.xlu0 %927
        %929 = vrot.lane.b32.xlu0 %v926, 1
        %v930 = vpop.permute.xlu0 %929
        %v931 = vmul.f32 %v928, %v272
        %v932 = vmul.f32 %v930, %v272
        %933 = vrot.lane.b32.xlu0 %v925, 127
        %v934 = vpop.permute.xlu0 %933
        %935 = vrot.lane.b32.xlu0 %v926, 127
        %v936 = vpop.permute.xlu0 %935
        %v937 = vmul.f32 %v934, %v274
        %v938 = vmul.f32 %v936, %v274
        %v939 = vmul.f32 %v931, -0.007866954
        %v940 = vmul.f32 %v932, -0.007866954
        %v941 = vmul.f32 %v925, -0.0061400393
        %v942 = vmul.f32 %v926, -0.0061400393
        %v943 = vadd.f32 %v939, %v941
        %v944 = vadd.f32 %v940, %v942
        %v945 = vmul.f32 %v937, -0.02129705
        %v946 = vmul.f32 %v938, -0.02129705
        %v947 = vadd.f32 %v943, %v945
        %v948 = vadd.f32 %v944, %v946
        %v949 = vmul.f32 %v931, -0.028841835
        %v950 = vmul.f32 %v932, -0.028841835
        %v951 = vmul.f32 %v925, -0.034655873
        %v952 = vmul.f32 %v926, -0.034655873
        %v953 = vadd.f32 %v949, %v951
        %v954 = vadd.f32 %v950, %v952
        %v955 = vmul.f32 %v937, 0.039621998
        %v956 = vmul.f32 %v938, 0.039621998
        %v957 = vadd.f32 %v953, %v955
        %v958 = vadd.f32 %v954, %v956
        %v959 = vmul.f32 %v931, -0.010351492
        %v960 = vmul.f32 %v932, -0.010351492
        %v961 = vmul.f32 %v925, -0.008897682
        %v962 = vmul.f32 %v926, -0.008897682
        %v963 = vadd.f32 %v959, %v961
        %v964 = vadd.f32 %v960, %v962
        %v965 = vmul.f32 %v937, -0.025445396
        %v966 = vmul.f32 %v938, -0.025445396
        %v967 = vadd.f32 %v963, %v965
        %v968 = vadd.f32 %v964, %v966
        %v969 = vrot.slane %v947, 7
        %v970 = vrot.slane %v948, 7
        %v971 = vsel %vm337, %v969, %v970
        %v972 = vsel %vm337, %v970, %v969
        %v973 = vmul.f32 %v972, %v277
        %v974 = vmul.f32 %v971, %v278
        %v975 = vadd.f32 %v957, %v973
        %v976 = vadd.f32 %v958, %v974
        %v977 = vrot.slane %v967, 1
        %v978 = vrot.slane %v968, 1
        %v979 = vsel %vm346, %v977, %v978
        %v980 = vsel %vm346, %v978, %v977
        %v981 = vmul.f32 %v979, %v281
        %v982 = vmul.f32 %v980, %v282
        %v983 = vadd.f32 %v975, %v981
        %v984 = vadd.f32 %v976, %v982
        %v985 = vmax.f32 %v983, 0.0
        %v986 = vmax.f32 %v984, 0.0
        %987 = vrot.lane.b32.xlu0 %v985, 1
        %v988 = vpop.permute.xlu0 %987
        %989 = vrot.lane.b32.xlu0 %v986, 1
        %v990 = vpop.permute.xlu0 %989
        %v991 = vmul.f32 %v988, %v272
        %v992 = vmul.f32 %v990, %v272
        %993 = vrot.lane.b32.xlu0 %v985, 127
        %v994 = vpop.permute.xlu0 %993
        %995 = vrot.lane.b32.xlu0 %v986, 127
        %v996 = vpop.permute.xlu0 %995
        %v997 = vmul.f32 %v994, %v274
        %v998 = vmul.f32 %v996, %v274
        %v999 = vmul.f32 %v991, -0.032473058
        %v1000 = vmul.f32 %v992, -0.032473058
        %v1001 = vmul.f32 %v985, -0.004280523
        %v1002 = vmul.f32 %v986, -0.004280523
        %v1003 = vadd.f32 %v999, %v1001
        %v1004 = vadd.f32 %v1000, %v1002
        %v1005 = vmul.f32 %v997, -0.018017583
        %v1006 = vmul.f32 %v998, -0.018017583
        %v1007 = vadd.f32 %v1003, %v1005
        %v1008 = vadd.f32 %v1004, %v1006
        %v1009 = vmul.f32 %v991, 0.007784822
        %v1010 = vmul.f32 %v992, 0.007784822
        %v1011 = vmul.f32 %v985, -0.010277853
        %v1012 = vmul.f32 %v986, -0.010277853
        %v1013 = vadd.f32 %v1009, %v1011
        %v1014 = vadd.f32 %v1010, %v1012
        %v1015 = vmul.f32 %v997, -0.023755368
        %v1016 = vmul.f32 %v998, -0.023755368
        %v1017 = vadd.f32 %v1013, %v1015
        %v1018 = vadd.f32 %v1014, %v1016
        %v1019 = vmul.f32 %v991, -0.00056705147
        %v1020 = vmul.f32 %v992, -0.00056705147
        %v1021 = vmul.f32 %v985, 0.008618417
        %v1022 = vmul.f32 %v986, 0.008618417
        %v1023 = vadd.f32 %v1019, %v1021
        %v1024 = vadd.f32 %v1020, %v1022
        %v1025 = vmul.f32 %v997, 0.0013383856
        %v1026 = vmul.f32 %v998, 0.0013383856
        %v1027 = vadd.f32 %v1023, %v1025
        %v1028 = vadd.f32 %v1024, %v1026
        %v1029 = vrot.slane %v1007, 7
        %v1030 = vrot.slane %v1008, 7
        %v1031 = vsel %vm337, %v1029, %v1030
        %v1032 = vsel %vm337, %v1030, %v1029
        %v1033 = vmul.f32 %v1032, %v277
        %v1034 = vmul.f32 %v1031, %v278
        %v1035 = vadd.f32 %v1017, %v1033
        %v1036 = vadd.f32 %v1018, %v1034
        %v1037 = vrot.slane %v1027, 1
        %v1038 = vrot.slane %v1028, 1
        %v1039 = vsel %vm346, %v1037, %v1038
        %v1040 = vsel %vm346, %v1038, %v1037
        %v1041 = vmul.f32 %v1039, %v281
        %v1042 = vmul.f32 %v1040, %v282
        %v1043 = vadd.f32 %v1035, %v1041
        %v1044 = vadd.f32 %v1036, %v1042
        %v1045 = vmax.f32 %v1043, 0.0
        %v1046 = vmax.f32 %v1044, 0.0
        %v1047 = vadd.f32 %v925, %v1045
        %v1048 = vadd.f32 %v926, %v1046
        %1049 = vrot.lane.b32.xlu0 %v1047, 1
        %v1050 = vpop.permute.xlu0 %1049
        %1051 = vrot.lane.b32.xlu0 %v1048, 1
        %v1052 = vpop.permute.xlu0 %1051
        %v1053 = vmul.f32 %v1050, %v272
        %v1054 = vmul.f32 %v1052, %v272
        %1055 = vrot.lane.b32.xlu0 %v1047, 127
        %v1056 = vpop.permute.xlu0 %1055
        %1057 = vrot.lane.b32.xlu0 %v1048, 127
        %v1058 = vpop.permute.xlu0 %1057
        %v1059 = vmul.f32 %v1056, %v274
        %v1060 = vmul.f32 %v1058, %v274
        %v1061 = vmul.f32 %v1053, -0.012686442
        %v1062 = vmul.f32 %v1054, -0.012686442
        %v1063 = vmul.f32 %v1047, -0.007254823
        %v1064 = vmul.f32 %v1048, -0.007254823
        %v1065 = vadd.f32 %v1061, %v1063
        %v1066 = vadd.f32 %v1062, %v1064
        %v1067 = vmul.f32 %v1059, -0.013449209
        %v1068 = vmul.f32 %v1060, -0.013449209
        %v1069 = vadd.f32 %v1065, %v1067
        %v1070 = vadd.f32 %v1066, %v1068
        %v1071 = vmul.f32 %v1053, -0.0071910634
        %v1072 = vmul.f32 %v1054, -0.0071910634
        %v1073 = vmul.f32 %v1047, -0.016262926
        %v1074 = vmul.f32 %v1048, -0.016262926
        %v1075 = vadd.f32 %v1071, %v1073
        %v1076 = vadd.f32 %v1072, %v1074
        %v1077 = vmul.f32 %v1059, -0.03452565
        %v1078 = vmul.f32 %v1060, -0.03452565
        %v1079 = vadd.f32 %v1075, %v1077
        %v1080 = vadd.f32 %v1076, %v1078
        %v1081 = vmul.f32 %v1053, 0.003548523
        %v1082 = vmul.f32 %v1054, 0.003548523
        %v1083 = vmul.f32 %v1047, -0.008035619
        %v1084 = vmul.f32 %v1048, -0.008035619
        %v1085 = vadd.f32 %v1081, %v1083
        %v1086 = vadd.f32 %v1082, %v1084
        %v1087 = vmul.f32 %v1059, -0.032603968
        %v1088 = vmul.f32 %v1060, -0.032603968
        %v1089 = vadd.f32 %v1085, %v1087
        %v1090 = vadd.f32 %v1086, %v1088
        %v1091 = vrot.slane %v1069, 7
        %v1092 = vrot.slane %v1070, 7
        %v1093 = vsel %vm337, %v1091, %v1092
        %v1094 = vsel %vm337, %v1092, %v1091
        %v1095 = vmul.f32 %v1094, %v277
        %v1096 = vmul.f32 %v1093, %v278
        %v1097 = vadd.f32 %v1079, %v1095
        %v1098 = vadd.f32 %v1080, %v1096
        %v1099 = vrot.slane %v1089, 1
        %v1100 = vrot.slane %v1090, 1
        %v1101 = vsel %vm346, %v1099, %v1100
        %v1102 = vsel %vm346, %v1100, %v1099
        %v1103 = vmul.f32 %v1101, %v281
        %v1104 = vmul.f32 %v1102, %v282
        %v1105 = vadd.f32 %v1097, %v1103
        %v1106 = vadd.f32 %v1098, %v1104
        %v1107 = vsub.f32 0.0, %v1105
        %v1108 = vsub.f32 0.0, %v1106
        %v1109 = vmul.f32 %v1107, 1.442695
        %v1110 = vpow.pop %v1109
        %v1111 = vmul.f32 %v1108, 1.442695
        %v1112 = vpow.pop %v1111
        %v1113 = vadd.f32 %v1110, 1.0
        %v1114 = vadd.f32 %v1112, 1.0
        %v1115 = vrcp.pop %v1113
        %v1116 = vrcp.pop %v1114
        %v1117 = vsub.f32 %v621, %v1115
        %v1118 = vsub.f32 %v622, %v1116
        %s1119 = sadd.s32 %s33, 1
        %p1120 = scmp.lt.s32.totalorder %s1119, 3
        // Predicated region
        $region33: #{tpu_custom_call.1} parent=23 // pred_check
          %p1121 = pneg %p1120
        $region34: #{tpu_custom_call.1} parent=23 // pred_check_branch
          %1123 = sbr.rel (%p1121) target = $region36
        $region35: #{tpu_custom_call.1} parent=23 // pred_region
          %v1124 = vadd.f32 %v264, %v1117
          %v1125 = vadd.f32 %v265, %v1118
          %1126 = vst [vmem:[#allocation2] sm:$0xff] %v1124
          %1127 = vst [vmem:[#allocation2 + $0x8] sm:$0xff] %v1125
        $region36: #{tpu_custom_call.1} parent=23 // pred_fallthru
          _
        %1128 = vst [vmem:[%s242] sm:$0xff] %v613
        %1129 = vst [vmem:[%s242 + $0x8] sm:$0xff] %v614
        %1130 = vst [vmem:[%s249] sm:$0xff] %v621
        %1131 = vst [vmem:[%s249 + $0x8] sm:$0xff] %v622
        %v1132 = vand.u32 2147483647, %v1117
        %v1133 = vand.u32 2147483647, %v1118
        %1134 = vst [vmem:[%s263] sm:$0xff] %v1132
        %1135 = vst [vmem:[%s263 + $0x8] sm:$0xff] %v1133
        %s1136 = sand.u32 %s76, 1
        %s1137 = scalar_lea.sflag [#allocation5], %s1136
        %s1138 = sand.u32 %s76, 1
        %s1139 = smul.addr %s1138, 16
        %s1140 = scalar_lea.vmem [#allocation6], %s1139
        %s1141 = sand.u32 %s28, 1
        %s1142 = scalar_lea.sflag [#allocation8], %s1141
        %s1143 = sand.u32 %s104, 1
        %s1144 = smul.addr %s1143, 16
        %s1145 = scalar_lea.vmem [#allocation7], %s1144
        %s1146 = sand.u32 %s28, 1
        %s1147 = scalar_lea.sflag [#allocation8], %s1146
        %s1148 = sand.u32 %s132, 1
        %s1149 = smul.addr %s1148, 16
        %s1150 = scalar_lea.vmem [#allocation9], %s1149
        %s1151 = sand.u32 %s160, 1
        %s1152 = scalar_lea.sflag [#allocation11], %s1151
        %s1153 = sand.u32 %s160, 1
        %s1154 = smul.addr %s1153, 16
        %s1155 = scalar_lea.vmem [#allocation10], %s1154
        // Predicated region
        $region37: #{tpu_custom_call.1} parent=23 // pred_check
          %p1156 = pneg %p86
        $region38: #{tpu_custom_call.1} parent=23 // pred_check_branch
          %1158 = sbr.rel (%p1156) target = $region40
        $region39: #{tpu_custom_call.1} parent=23 // pred_region
          %s1160 = ssub.s32 256, 256
          %1161 = vsyncadd %s1137, %s1160
          %s1162 = smul.addr %s33, 2
          %s1163 = smul.addr %s32, 6
          %s1164 = sadd.s32 %s1162, %s1163
          %s1165 = smul.addr %s1164, 128
          %s1166 = scalar_lea.hbm %s1, %s1165
          %s1167 = sshll.u32 %s1140, 4
          %s1168 = int_to_ptr.vmem [resolvable:$true] %s1167
          %1173 = dma.vmem_to_hbm [thread:$0]  %s1168, 256, %s1166, %s1137, 128, 128, 8
        $region40: #{tpu_custom_call.1} parent=23 // pred_fallthru
          _
        // Predicated region
        $region41: #{tpu_custom_call.1} parent=23 // pred_check
          %p1174 = pneg %p114
        $region42: #{tpu_custom_call.1} parent=23 // pred_check_branch
          %1176 = sbr.rel (%p1174) target = $region44
        $region43: #{tpu_custom_call.1} parent=23 // pred_region
          %s1178 = ssub.s32 256, 256
          %1179 = vsyncadd %s1142, %s1178
          %s1180 = smul.addr %s33, 2
          %s1181 = smul.addr %s32, 6
          %s1182 = sadd.s32 %s1180, %s1181
          %s1183 = smul.addr %s1182, 128
          %s1184 = scalar_lea.hbm %s2, %s1183
          %s1185 = sshll.u32 %s1145, 4
          %s1186 = int_to_ptr.vmem [resolvable:$true] %s1185
          %1191 = dma.vmem_to_hbm [thread:$0]  %s1186, 256, %s1184, %s1142, 128, 128, 8
        $region44: #{tpu_custom_call.1} parent=23 // pred_fallthru
          _
        // Predicated region
        $region45: #{tpu_custom_call.1} parent=23 // pred_check
          %p1192 = pneg %p142
        $region46: #{tpu_custom_call.1} parent=23 // pred_check_branch
          %1194 = sbr.rel (%p1192) target = $region48
        $region47: #{tpu_custom_call.1} parent=23 // pred_region
          %s1196 = ssub.s32 256, 256
          %1197 = vsyncadd %s1147, %s1196
          %s1198 = smul.addr %s33, 2
          %s1199 = smul.addr %s32, 6
          %s1200 = sadd.s32 %s1198, %s1199
          %s1201 = smul.addr %s1200, 128
          %s1202 = scalar_lea.hbm %s3, %s1201
          %s1203 = sshll.u32 %s1150, 4
          %s1204 = int_to_ptr.vmem [resolvable:$true] %s1203
          %1209 = dma.vmem_to_hbm [thread:$0]  %s1204, 256, %s1202, %s1147, 128, 128, 8
        $region48: #{tpu_custom_call.1} parent=23 // pred_fallthru
          _
        // Predicated region
        $region49: #{tpu_custom_call.1} parent=23 // pred_check
          %p1210 = pneg %p170
        $region50: #{tpu_custom_call.1} parent=23 // pred_check_branch
          %1212 = sbr.rel (%p1210) target = $region52
        $region51: #{tpu_custom_call.1} parent=23 // pred_region
          %s1214 = ssub.s32 256, 256
          %1215 = vsyncadd %s1152, %s1214
          %s1216 = smul.addr %s33, 2
          %s1217 = smul.addr %s32, 6
          %s1218 = sadd.s32 %s1216, %s1217
          %s1219 = smul.addr %s1218, 128
          %s1220 = scalar_lea.hbm %s4, %s1219
          %s1221 = sshll.u32 %s1155, 4
          %s1222 = int_to_ptr.vmem [resolvable:$true] %s1221
          %1227 = dma.vmem_to_hbm [thread:$0]  %s1222, 256, %s1220, %s1152, 128, 128, 8
        $region52: #{tpu_custom_call.1} parent=23 // pred_fallthru
          _
      $region24: #{tpu_custom_call.1} parent=5 // pred_fallthru
        _
      %p1228 = scmp.le.s32.totalorder 2, %s23
      // Predicated region
      $region53: #{tpu_custom_call.1} parent=5 // pred_check
        %p1229 = pneg %p1228
      $region54: #{tpu_custom_call.1} parent=5 // pred_check_branch
        %1231 = sbr.rel (%p1229) target = $region56
      $region55: #{tpu_custom_call.1} parent=5 // pred_region
        %s1232 = ssub.s32 %s23, 2
        // Predicated region
        $region57: #{tpu_custom_call.1} parent=55 // pred_check
          %p1233 = pneg %p92
        $region58: #{tpu_custom_call.1} parent=55 // pred_check_branch
          %1235 = sbr.rel (%p1233) target = $region60
        $region59: #{tpu_custom_call.1} parent=55 // pred_region
          %s1236 = sand.u32 %s77, 1
          %s1237 = scalar_lea.sflag [#allocation5], %s1236
          %s1238 = sand.u32 %s77, 1
          %s1239 = smul.addr %s1238, 16
          %s1240 = scalar_lea.vmem [#allocation6], %s1239
          %1241 = dma.done %s1237, 256
        $region60: #{tpu_custom_call.1} parent=55 // pred_fallthru
          _
        // Predicated region
        $region61: #{tpu_custom_call.1} parent=55 // pred_check
          %p1242 = pneg %p120
        $region62: #{tpu_custom_call.1} parent=55 // pred_check_branch
          %1244 = sbr.rel (%p1242) target = $region64
        $region63: #{tpu_custom_call.1} parent=55 // pred_region
          %s1245 = sand.u32 %s29, 1
          %s1246 = scalar_lea.sflag [#allocation8], %s1245
          %s1247 = sand.u32 %s105, 1
          %s1248 = smul.addr %s1247, 16
          %s1249 = scalar_lea.vmem [#allocation7], %s1248
          %1250 = dma.done %s1246, 256
        $region64: #{tpu_custom_call.1} parent=55 // pred_fallthru
          _
        // Predicated region
        $region65: #{tpu_custom_call.1} parent=55 // pred_check
          %p1251 = pneg %p148
        $region66: #{tpu_custom_call.1} parent=55 // pred_check_branch
          %1253 = sbr.rel (%p1251) target = $region68
        $region67: #{tpu_custom_call.1} parent=55 // pred_region
          %s1254 = sand.u32 %s29, 1
          %s1255 = scalar_lea.sflag [#allocation8], %s1254
          %s1256 = sand.u32 %s133, 1
          %s1257 = smul.addr %s1256, 16
          %s1258 = scalar_lea.vmem [#allocation9], %s1257
          %1259 = dma.done %s1255, 256
        $region68: #{tpu_custom_call.1} parent=55 // pred_fallthru
          _
        // Predicated region
        $region69: #{tpu_custom_call.1} parent=55 // pred_check
          %p1260 = pneg %p176
        $region70: #{tpu_custom_call.1} parent=55 // pred_check_branch
          %1262 = sbr.rel (%p1260) target = $region72
        $region71: #{tpu_custom_call.1} parent=55 // pred_region
          %s1263 = sand.u32 %s161, 1
          %s1264 = scalar_lea.sflag [#allocation11], %s1263
          %s1265 = sand.u32 %s161, 1
          %s1266 = smul.addr %s1265, 16
          %s1267 = scalar_lea.vmem [#allocation10], %s1266
          %1268 = dma.done %s1264, 256
        $region72: #{tpu_custom_call.1} parent=55 // pred_fallthru
          _
      $region56: #{tpu_custom_call.1} parent=5 // pred_fallthru
        _
    $region6: #{tpu_custom_call.1} parent=1 // loop_footer
      %s27 = sadd.s32 1, %s23
    $region7: #{tpu_custom_call.1} parent=1 // loop_footer_branch
      %22 = sbr.rel target = $region3
    $region8: #{tpu_custom_call.1} parent=1 // loop_exit
      _
    %1269 = vsyncpa [#allocation4], 1
    %s1270 = scalar_lea.sflag [#allocation4], 1
    %1271 = vsyncpa %s1270, 1
    %1272 = vsyncpa [#allocation5], 1
    %s1273 = scalar_lea.sflag [#allocation5], 1
    %1274 = vsyncpa %s1273, 1
    %1275 = vsyncpa [#allocation8], 1
    %s1276 = scalar_lea.sflag [#allocation8], 1
    %1277 = vsyncpa %s1276, 1
    %1278 = vsyncpa [#allocation11], 1
    %s1279 = scalar_lea.sflag [#allocation11], 1
    %1280 = vsyncpa %s1279, 1

</llo_original>
